<compile_context>
chip_gen: v7x
topology: tpu7x:2x2x1
jax: 0.10.0
libtpu: 0.0.40
codegen_flags: <defaults>
</compile_context>

<pallas_src>
import functools
import math

import jax
import jax.numpy as jnp
from jax.experimental import pallas as pl
from jax.experimental.pallas import tpu as pltpu


def _round_up(x, m):
    return ((x + m - 1) // m) * m


def _choose_tile(n, cap, align):
    cap = max(align, (cap // align) * align)
    if n <= cap:
        return _round_up(n, align)
    return cap


def _flash_attn_kernel(q_ref, k_ref, v_ref, wo_ref, bo_ref, o_ref,
                       m_sc, l_sc, acc_sc, *, heads, dim_head, tk, nkv,
                       mask_needed):
    # q_ref: (TQ, inner), k_ref/v_ref: (TK, inner), wo_ref: (inner, dim)
    # bo_ref: (1, dim) fp32, o_ref: (TQ, dim)
    # m_sc/l_sc: (TQ, heads) fp32, acc_sc: (TQ, inner) fp32
    ki = pl.program_id(2)

    @pl.when(ki == 0)
    def _init():
        m_sc[...] = jnp.full(m_sc.shape, -jnp.inf, dtype=jnp.float32)
        l_sc[...] = jnp.zeros(l_sc.shape, dtype=jnp.float32)
        acc_sc[...] = jnp.zeros(acc_sc.shape, dtype=jnp.float32)

    if mask_needed:
        cols = jax.lax.broadcasted_iota(jnp.int32, (1, tk), 1) + ki * tk
        kv_mask = cols < nkv                                   # (1, TK)

    # Per-head online softmax: live (TQ, TK) intermediates are bounded to one
    # head at a time; all matmuls are plain 2D MXU calls in bf16 with fp32
    # accumulation.  The softmax scale is already folded into q.
    for h in range(heads):
        sl = slice(h * dim_head, (h + 1) * dim_head)
        q_h = q_ref[:, sl]                                     # (TQ, d)
        k_h = k_ref[:, sl]                                     # (TK, d)
        v_h = v_ref[:, sl]                                     # (TK, d)

        s = jax.lax.dot_general(q_h, k_h, (((1,), (1,)), ((), ())),
                                preferred_element_type=jnp.float32)  # (TQ, TK)
        if mask_needed:
            s = jnp.where(kv_mask, s, jnp.float32(-1e30))

        m_prev = m_sc[:, h:h + 1]                              # (TQ, 1)
        m_new = jnp.maximum(m_prev, jnp.max(s, axis=-1, keepdims=True))
        alpha = jnp.exp(m_prev - m_new)
        p = jnp.exp(s - m_new)

        l_sc[:, h:h + 1] = alpha * l_sc[:, h:h + 1] + jnp.sum(
            p, axis=-1, keepdims=True)
        pv = jax.lax.dot_general(p.astype(v_h.dtype), v_h,
                                 (((1,), (0,)), ((), ())),
                                 preferred_element_type=jnp.float32)  # (TQ, d)
        acc_sc[:, sl] = alpha * acc_sc[:, sl] + pv
        m_sc[:, h:h + 1] = m_new

    @pl.when(ki == pl.num_programs(2) - 1)
    def _finalize():
        # Per-head normalization written back in place, then a single
        # K = heads*dim_head output-projection GEMM + bias.
        for h in range(heads):
            sl = slice(h * dim_head, (h + 1) * dim_head)
            inv = pl.reciprocal(l_sc[:, h:h + 1], approx=True)
            acc_sc[:, sl] = acc_sc[:, sl] * inv
        out = acc_sc[...].astype(wo_ref.dtype)                 # (TQ, inner)
        y = jax.lax.dot_general(out, wo_ref[...], (((1,), (0,)), ((), ())),
                                preferred_element_type=jnp.float32)  # (TQ, dim)
        o_ref[...] = (y + bo_ref[...]).astype(o_ref.dtype)


def cross_attention(x_q, x_kv, wq_t, wkv_t, wo_t, bo, *, heads, dim_head,
                    q_tile_cap=256, kv_tile_cap=256, vmem_limit_bytes=None):
    """x_q: (B, Nq, dim), x_kv: (B, Nkv, dim); weights in (in, out) layout.

    For project_out=False (heads==1 and dim_head==dim) pass an identity wo_t
    and a zero bias — mathematically identical to nn.Identity().
    """
    B, Nq, dim = x_q.shape
    Bk, Nkv, dim_kv = x_kv.shape
    assert dim == dim_kv and B == Bk
    inner = heads * dim_head
    scale = dim_head ** (-0.5)

    out_dtype = x_q.dtype
    compute_dtype = jnp.bfloat16 if out_dtype == jnp.float32 else out_dtype

    # ---- projections hoisted to plain batched XLA GEMMs; scale folded into
    #      Wq; results cast to bf16 for the MXU (fp32 accumulation in-kernel).
    wk_t = wkv_t[:, :inner]
    wv_t = wkv_t[:, inner:]
    q = jnp.einsum('bnd,de->bne', x_q, wq_t * scale).astype(compute_dtype)
    k = jnp.einsum('bnd,de->bne', x_kv, wk_t).astype(compute_dtype)
    v = jnp.einsum('bnd,de->bne', x_kv, wv_t).astype(compute_dtype)
    # NOTE: no (B,N,H,d)->(B,H,N,d) transpose (would be a full extra HBM
    # pass); heads are sliced inside the kernel from the lane-dense layout.

    wo_c = wo_t.astype(compute_dtype)                 # (inner, dim)
    bo2 = jnp.asarray(bo, jnp.float32).reshape(1, dim)

    # ---- tile selection + VMEM budgeting -----------------------------------
    TQ = _choose_tile(Nq, q_tile_cap, 8)
    TK = _choose_tile(Nkv, kv_tile_cap, 128 if Nkv >= 128 else 8)

    in_b = jnp.dtype(compute_dtype).itemsize
    out_b = jnp.dtype(out_dtype).itemsize

    def _est(tq, tk):
        lane = lambda x: _round_up(max(x, 1), 128)
        sub = lambda x: _round_up(max(x, 1), 8)
        tiles = 2 * (sub(tq) + 2 * sub(tk)) * lane(inner) * in_b   # q,k,v x2buf
        outs = 2 * sub(tq) * lane(dim) * out_b
        consts = 2 * (sub(inner) * lane(dim) * in_b + 8 * lane(dim) * 4)
        scr = sub(tq) * lane(inner) * 4 + 2 * sub(tq) * lane(heads) * 4
        inter = 4 * sub(tq) * lane(tk) * 4            # per-head s/p temps
        return tiles + outs + consts + scr + inter

    budget = ((vmem_limit_bytes or (48 << 20)) * 3) // 4
    while _est(TQ, TK) > budget and TK > 128:
        TK = max(128, TK // 2)
    while _est(TQ, TK) > budget and TQ > 64:
        TQ = max(64, TQ // 2)
    need = _est(TQ, TK)
    if vmem_limit_bytes is None and need > (12 << 20):
        vmem_limit_bytes = min(48 << 20, _round_up(2 * need, 1 << 20))

    # ---- pad sequence lengths to tile multiples (masked in-kernel) ---------
    Nq_pad = _round_up(Nq, TQ)
    Nkv_pad = _round_up(Nkv, TK)
    if Nq_pad != Nq:
        q = jnp.pad(q, ((0, 0), (0, Nq_pad - Nq), (0, 0)))
    if Nkv_pad != Nkv:
        k = jnp.pad(k, ((0, 0), (0, Nkv_pad - Nkv), (0, 0)))
        v = jnp.pad(v, ((0, 0), (0, Nkv_pad - Nkv), (0, 0)))

    grid = (B, Nq_pad // TQ, Nkv_pad // TK)
    kernel = functools.partial(
        _flash_attn_kernel, heads=heads, dim_head=dim_head, tk=TK, nkv=Nkv,
        mask_needed=(Nkv_pad != Nkv))

    out = pl.pallas_call(
        kernel,
        out_shape=jax.ShapeDtypeStruct((B, Nq_pad, dim), out_dtype),
        grid=grid,
        in_specs=[
            pl.BlockSpec((None, TQ, inner), lambda b, qi, ki: (b, qi, 0)),
            pl.BlockSpec((None, TK, inner), lambda b, qi, ki: (b, ki, 0)),
            pl.BlockSpec((None, TK, inner), lambda b, qi, ki: (b, ki, 0)),
            pl.BlockSpec((inner, dim), lambda b, qi, ki: (0, 0)),
            pl.BlockSpec((1, dim), lambda b, qi, ki: (0, 0)),
        ],
        out_specs=pl.BlockSpec((None, TQ, dim), lambda b, qi, ki: (b, qi, 0)),
        scratch_shapes=[
            pltpu.VMEM((TQ, heads), jnp.float32),     # running max m
            pltpu.VMEM((TQ, heads), jnp.float32),     # running denom l
            pltpu.VMEM((TQ, inner), jnp.float32),     # fp32 accumulator
        ],
        compiler_params=pltpu.CompilerParams(
            dimension_semantics=("parallel", "parallel", "arbitrary"),
            vmem_limit_bytes=vmem_limit_bytes),
    )(q, k, v, wo_c, bo2)

    if Nq_pad != Nq:
        out = out[:, :Nq, :]
    return out


def _reference(x_q, x_kv, wq_t, wkv_t, wo_t, bo, *, heads, dim_head):
    """Pure-JAX fp32 reference mirroring the PyTorch forward."""
    B, Nq, dim = x_q.shape
    inner = heads * dim_head
    scale = dim_head ** (-0.5)
    q = x_q @ wq_t
    kv = x_kv @ wkv_t
    k, v = kv[..., :inner], kv[..., inner:]

    def split_heads(t):
        b, n, _ = t.shape
        return t.reshape(b, n, heads, dim_head).transpose(0, 2, 1, 3)

    qh, kh, vh = split_heads(q), split_heads(k), split_heads(v)
    dots = jnp.einsum('bhid,bhjd->bhij', qh, kh) * scale
    attn = jax.nn.softmax(dots, axis=-1)
    out = jnp.einsum('bhij,bhjd->bhid', attn, vh)
    out = out.transpose(0, 2, 1, 3).reshape(B, Nq, inner)
    return out @ wo_t + bo


if __name__ == "__main__":
    # Small shapes consistent with the module.
    B, Nq, Nkv = 2, 8, 16
    dim, heads, dim_head = 32, 4, 8
    inner = heads * dim_head

    key = jax.random.PRNGKey(0)
    k_xq, k_xkv, k_wq, k_wkv, k_wo, k_bo = jax.random.split(key, 6)

    x_q = jax.random.normal(k_xq, (B, Nq, dim), dtype=jnp.float32)
    x_kv = jax.random.normal(k_xkv, (B, Nkv, dim), dtype=jnp.float32)

    # nn.Linear-style init U(-1/sqrt(in), 1/sqrt(in)); weights stored (out, in).
    def linear_w(k, out_f, in_f):
        bound = 1.0 / math.sqrt(in_f)
        return jax.random.uniform(k, (out_f, in_f), jnp.float32, -bound, bound)

    wq = linear_w(k_wq, inner, dim)          # to_q.weight  (inner, dim)
    wkv = linear_w(k_wkv, 2 * inner, dim)    # to_kv.weight (2*inner, dim)
    wo = linear_w(k_wo, dim, inner)          # to_out[0].weight (dim, inner)
    bo = jax.random.uniform(k_bo, (1, dim), jnp.float32,
                            -1.0 / math.sqrt(inner), 1.0 / math.sqrt(inner))

    # kernel/wrapper consume (in, out) weight layout
    wq_t, wkv_t, wo_t = wq.T, wkv.T, wo.T

    out = cross_attention(x_q, x_kv, wq_t, wkv_t, wo_t, bo,
                          heads=heads, dim_head=dim_head)
    out = jax.block_until_ready(out)

    ref = _reference(x_q, x_kv, wq_t, wkv_t, wo_t, bo,
                     heads=heads, dim_head=dim_head)
    assert out.shape == (B, Nq, dim)
    assert jnp.allclose(out, ref, atol=2e-2, rtol=2e-2)

    print("KERNEL_OK")
</pallas_src>

<mosaic_0001>
module attributes {stable_mosaic.version = 11 : i64} {
  func.func @_flash_attn_kernel(%arg0: i32, %arg1: i32, %arg2: i32, %arg3: memref<1x8x32xbf16, #tpu.memory_space<vmem>>, %arg4: memref<1x16x32xbf16, #tpu.memory_space<vmem>>, %arg5: memref<1x16x32xbf16, #tpu.memory_space<vmem>>, %arg6: memref<32x32xbf16, #tpu.memory_space<vmem>>, %arg7: memref<1x32xf32, #tpu.memory_space<vmem>>, %arg8: memref<1x8x32xf32, #tpu.memory_space<vmem>>, %arg9: memref<8x4xf32, #tpu.memory_space<vmem>>, %arg10: memref<8x4xf32, #tpu.memory_space<vmem>>, %arg11: memref<8x32xf32, #tpu.memory_space<vmem>>) attributes {dimension_semantics = [#tpu.dimension_semantics<parallel>, #tpu.dimension_semantics<parallel>, #tpu.dimension_semantics<arbitrary>], iteration_bounds = array<i64: 2, 1, 1>, scalar_prefetch = 0 : i64, scratch_operands = 3 : i64, tpu.core_type = #tpu.core_type<tc>, window_params = [{transform_indices = @transform_0, window_bounds = array<i64: 1, 8, 32>}, {transform_indices = @transform_1, window_bounds = array<i64: 1, 16, 32>}, {transform_indices = @transform_2, window_bounds = array<i64: 1, 16, 32>}, {pipeline_mode = #tpu.pipeline_mode<synchronous>, transform_indices = @transform_3, window_bounds = array<i64: 32, 32>}, {pipeline_mode = #tpu.pipeline_mode<synchronous>, transform_indices = @transform_4, window_bounds = array<i64: 1, 32>}, {transform_indices = @transform_5, window_bounds = array<i64: 1, 8, 32>}]} {
    %c0_i32 = arith.constant 0 : i32
    %0 = arith.cmpi eq, %arg2, %c0_i32 : i32
    %1 = arith.extui %0 : i1 to i32
    %c0_i32_0 = arith.constant 0 : i32
    %2 = arith.cmpi ne, %1, %c0_i32_0 : i32
    scf.if %2 {
      %cst_95 = arith.constant 0xFF800000 : f32
      %126 = vector.broadcast %cst_95 : f32 to vector<8x4xf32>
      %c0_96 = arith.constant 0 : index
      %c0_97 = arith.constant 0 : index
      %127 = vector.load %arg9[%c0_96, %c0_97] : memref<8x4xf32, #tpu.memory_space<vmem>>, vector<8x4xf32>
      tpu.vector_store %arg9[%c0_96, %c0_97], %126 {strides = array<i32>} : memref<8x4xf32, #tpu.memory_space<vmem>>, vector<8x4xf32>,
      %cst_98 = arith.constant 0.000000e+00 : f32
      %128 = vector.broadcast %cst_98 : f32 to vector<8x4xf32>
      %c0_99 = arith.constant 0 : index
      %c0_100 = arith.constant 0 : index
      %129 = vector.load %arg10[%c0_99, %c0_100] : memref<8x4xf32, #tpu.memory_space<vmem>>, vector<8x4xf32>
      tpu.vector_store %arg10[%c0_99, %c0_100], %128 {strides = array<i32>} : memref<8x4xf32, #tpu.memory_space<vmem>>, vector<8x4xf32>,
      %cst_101 = arith.constant 0.000000e+00 : f32
      %130 = vector.broadcast %cst_101 : f32 to vector<8x32xf32>
      %c0_102 = arith.constant 0 : index
      %c0_103 = arith.constant 0 : index
      %131 = vector.load %arg11[%c0_102, %c0_103] : memref<8x32xf32, #tpu.memory_space<vmem>>, vector<8x32xf32>
      tpu.vector_store %arg11[%c0_102, %c0_103], %130 {strides = array<i32>} : memref<8x32xf32, #tpu.memory_space<vmem>>, vector<8x32xf32>,
    } else {
    }
    %c0 = arith.constant 0 : index
    %c0_1 = arith.constant 0 : index
    %c0_2 = arith.constant 0 : index
    %3 = vector.load %arg3[%c0, %c0_1, %c0_2] : memref<1x8x32xbf16, #tpu.memory_space<vmem>>, vector<1x8x8xbf16>
    %4 = vector.shape_cast %3 : vector<1x8x8xbf16> to vector<8x8xbf16>
    %c0_3 = arith.constant 0 : index
    %c0_4 = arith.constant 0 : index
    %c0_5 = arith.constant 0 : index
    %5 = vector.load %arg4[%c0_3, %c0_4, %c0_5] : memref<1x16x32xbf16, #tpu.memory_space<vmem>>, vector<1x16x8xbf16>
    %6 = vector.shape_cast %5 : vector<1x16x8xbf16> to vector<16x8xbf16>
    %c0_6 = arith.constant 0 : index
    %c0_7 = arith.constant 0 : index
    %c0_8 = arith.constant 0 : index
    %7 = vector.load %arg5[%c0_6, %c0_7, %c0_8] : memref<1x16x32xbf16, #tpu.memory_space<vmem>>, vector<1x16x8xbf16>
    %8 = vector.shape_cast %7 : vector<1x16x8xbf16> to vector<16x8xbf16>
    %cst = arith.constant dense<0.000000e+00> : vector<8x16xf32>
    %9 = tpu.matmul %4, %6, %cst {dimension_numbers = #tpu.dot_dimension_numbers<[1], [1], [0], [0], [0, 0, 1, 0], [], []>} : vector<8x8xbf16>, vector<16x8xbf16>, vector<8x16xf32> -> vector<8x16xf32>
    %c0_9 = arith.constant 0 : index
    %c0_10 = arith.constant 0 : index
    %10 = vector.load %arg9[%c0_9, %c0_10] : memref<8x4xf32, #tpu.memory_space<vmem>>, vector<8x1xf32>
    %cst_11 = arith.constant dense<0xFF800000> : vector<8xf32>
    %11 = vector.multi_reduction <maximumf>, %9, %cst_11 [1] : vector<8x16xf32> to vector<8xf32>
    %12 = vector.shape_cast %11 : vector<8xf32> to vector<8x1xf32>
    %13 = arith.maximumf %10, %12 : vector<8x1xf32>
    %14 = arith.subf %10, %13 : vector<8x1xf32>
    %15 = math.exp %14 : vector<8x1xf32>
    %16 = vector.broadcast %13 : vector<8x1xf32> to vector<8x16xf32>
    %17 = arith.subf %9, %16 : vector<8x16xf32>
    %18 = math.exp %17 : vector<8x16xf32>
    %c0_12 = arith.constant 0 : index
    %c0_13 = arith.constant 0 : index
    %19 = vector.load %arg10[%c0_12, %c0_13] : memref<8x4xf32, #tpu.memory_space<vmem>>, vector<8x1xf32>
    %20 = arith.mulf %15, %19 : vector<8x1xf32>
    %cst_14 = arith.constant dense<0.000000e+00> : vector<8xf32>
    %21 = vector.multi_reduction <add>, %18, %cst_14 [1] : vector<8x16xf32> to vector<8xf32>
    %22 = vector.shape_cast %21 : vector<8xf32> to vector<8x1xf32>
    %23 = arith.addf %20, %22 : vector<8x1xf32>
    %c0_15 = arith.constant 0 : index
    %c0_16 = arith.constant 0 : index
    %24 = vector.load %arg10[%c0_15, %c0_16] : memref<8x4xf32, #tpu.memory_space<vmem>>, vector<8x1xf32>
    tpu.vector_store %arg10[%c0_15, %c0_16], %23 {strides = array<i32>} : memref<8x4xf32, #tpu.memory_space<vmem>>, vector<8x1xf32>,
    %25 = arith.truncf %18 : vector<8x16xf32> to vector<8x16xbf16>
    %cst_17 = arith.constant dense<0.000000e+00> : vector<8x8xf32>
    %26 = tpu.matmul %25, %8, %cst_17 {dimension_numbers = #tpu.dot_dimension_numbers<[1], [0], [0], [1], [0, 0, 1, 1], [], []>} : vector<8x16xbf16>, vector<16x8xbf16>, vector<8x8xf32> -> vector<8x8xf32>
    %c0_18 = arith.constant 0 : index
    %c0_19 = arith.constant 0 : index
    %27 = vector.load %arg11[%c0_18, %c0_19] : memref<8x32xf32, #tpu.memory_space<vmem>>, vector<8x8xf32>
    %28 = vector.broadcast %15 : vector<8x1xf32> to vector<8x8xf32>
    %29 = arith.mulf %28, %27 : vector<8x8xf32>
    %30 = arith.addf %29, %26 : vector<8x8xf32>
    %c0_20 = arith.constant 0 : index
    %c0_21 = arith.constant 0 : index
    %31 = vector.load %arg11[%c0_20, %c0_21] : memref<8x32xf32, #tpu.memory_space<vmem>>, vector<8x8xf32>
    tpu.vector_store %arg11[%c0_20, %c0_21], %30 {strides = array<i32>} : memref<8x32xf32, #tpu.memory_space<vmem>>, vector<8x8xf32>,
    %c0_22 = arith.constant 0 : index
    %c0_23 = arith.constant 0 : index
    %32 = vector.load %arg9[%c0_22, %c0_23] : memref<8x4xf32, #tpu.memory_space<vmem>>, vector<8x1xf32>
    tpu.vector_store %arg9[%c0_22, %c0_23], %13 {strides = array<i32>} : memref<8x4xf32, #tpu.memory_space<vmem>>, vector<8x1xf32>,
    %c0_24 = arith.constant 0 : index
    %c0_25 = arith.constant 0 : index
    %c8 = arith.constant 8 : index
    %33 = vector.load %arg3[%c0_24, %c0_25, %c8] : memref<1x8x32xbf16, #tpu.memory_space<vmem>>, vector<1x8x8xbf16>
    %34 = vector.shape_cast %33 : vector<1x8x8xbf16> to vector<8x8xbf16>
    %c0_26 = arith.constant 0 : index
    %c0_27 = arith.constant 0 : index
    %c8_28 = arith.constant 8 : index
    %35 = vector.load %arg4[%c0_26, %c0_27, %c8_28] : memref<1x16x32xbf16, #tpu.memory_space<vmem>>, vector<1x16x8xbf16>
    %36 = vector.shape_cast %35 : vector<1x16x8xbf16> to vector<16x8xbf16>
    %c0_29 = arith.constant 0 : index
    %c0_30 = arith.constant 0 : index
    %c8_31 = arith.constant 8 : index
    %37 = vector.load %arg5[%c0_29, %c0_30, %c8_31] : memref<1x16x32xbf16, #tpu.memory_space<vmem>>, vector<1x16x8xbf16>
    %38 = vector.shape_cast %37 : vector<1x16x8xbf16> to vector<16x8xbf16>
    %cst_32 = arith.constant dense<0.000000e+00> : vector<8x16xf32>
    %39 = tpu.matmul %34, %36, %cst_32 {dimension_numbers = #tpu.dot_dimension_numbers<[1], [1], [0], [0], [0, 0, 1, 0], [], []>} : vector<8x8xbf16>, vector<16x8xbf16>, vector<8x16xf32> -> vector<8x16xf32>
    %c0_33 = arith.constant 0 : index
    %c1 = arith.constant 1 : index
    %40 = vector.load %arg9[%c0_33, %c1] : memref<8x4xf32, #tpu.memory_space<vmem>>, vector<8x1xf32>
    %cst_34 = arith.constant dense<0xFF800000> : vector<8xf32>
    %41 = vector.multi_reduction <maximumf>, %39, %cst_34 [1] : vector<8x16xf32> to vector<8xf32>
    %42 = vector.shape_cast %41 : vector<8xf32> to vector<8x1xf32>
    %43 = arith.maximumf %40, %42 : vector<8x1xf32>
    %44 = arith.subf %40, %43 : vector<8x1xf32>
    %45 = math.exp %44 : vector<8x1xf32>
    %46 = vector.broadcast %43 : vector<8x1xf32> to vector<8x16xf32>
    %47 = arith.subf %39, %46 : vector<8x16xf32>
    %48 = math.exp %47 : vector<8x16xf32>
    %c0_35 = arith.constant 0 : index
    %c1_36 = arith.constant 1 : index
    %49 = vector.load %arg10[%c0_35, %c1_36] : memref<8x4xf32, #tpu.memory_space<vmem>>, vector<8x1xf32>
    %50 = arith.mulf %45, %49 : vector<8x1xf32>
    %cst_37 = arith.constant dense<0.000000e+00> : vector<8xf32>
    %51 = vector.multi_reduction <add>, %48, %cst_37 [1] : vector<8x16xf32> to vector<8xf32>
    %52 = vector.shape_cast %51 : vector<8xf32> to vector<8x1xf32>
    %53 = arith.addf %50, %52 : vector<8x1xf32>
    %c0_38 = arith.constant 0 : index
    %c1_39 = arith.constant 1 : index
    %54 = vector.load %arg10[%c0_38, %c1_39] : memref<8x4xf32, #tpu.memory_space<vmem>>, vector<8x1xf32>
    tpu.vector_store %arg10[%c0_38, %c1_39], %53 {strides = array<i32>} : memref<8x4xf32, #tpu.memory_space<vmem>>, vector<8x1xf32>,
    %55 = arith.truncf %48 : vector<8x16xf32> to vector<8x16xbf16>
    %cst_40 = arith.constant dense<0.000000e+00> : vector<8x8xf32>
    %56 = tpu.matmul %55, %38, %cst_40 {dimension_numbers = #tpu.dot_dimension_numbers<[1], [0], [0], [1], [0, 0, 1, 1], [], []>} : vector<8x16xbf16>, vector<16x8xbf16>, vector<8x8xf32> -> vector<8x8xf32>
    %c0_41 = arith.constant 0 : index
    %c8_42 = arith.constant 8 : index
    %57 = vector.load %arg11[%c0_41, %c8_42] : memref<8x32xf32, #tpu.memory_space<vmem>>, vector<8x8xf32>
    %58 = vector.broadcast %45 : vector<8x1xf32> to vector<8x8xf32>
    %59 = arith.mulf %58, %57 : vector<8x8xf32>
    %60 = arith.addf %59, %56 : vector<8x8xf32>
    %c0_43 = arith.constant 0 : index
    %c8_44 = arith.constant 8 : index
    %61 = vector.load %arg11[%c0_43, %c8_44] : memref<8x32xf32, #tpu.memory_space<vmem>>, vector<8x8xf32>
    tpu.vector_store %arg11[%c0_43, %c8_44], %60 {strides = array<i32>} : memref<8x32xf32, #tpu.memory_space<vmem>>, vector<8x8xf32>,
    %c0_45 = arith.constant 0 : index
    %c1_46 = arith.constant 1 : index
    %62 = vector.load %arg9[%c0_45, %c1_46] : memref<8x4xf32, #tpu.memory_space<vmem>>, vector<8x1xf32>
    tpu.vector_store %arg9[%c0_45, %c1_46], %43 {strides = array<i32>} : memref<8x4xf32, #tpu.memory_space<vmem>>, vector<8x1xf32>,
    %c0_47 = arith.constant 0 : index
    %c0_48 = arith.constant 0 : index
    %c16 = arith.constant 16 : index
    %63 = vector.load %arg3[%c0_47, %c0_48, %c16] : memref<1x8x32xbf16, #tpu.memory_space<vmem>>, vector<1x8x8xbf16>
    %64 = vector.shape_cast %63 : vector<1x8x8xbf16> to vector<8x8xbf16>
    %c0_49 = arith.constant 0 : index
    %c0_50 = arith.constant 0 : index
    %c16_51 = arith.constant 16 : index
    %65 = vector.load %arg4[%c0_49, %c0_50, %c16_51] : memref<1x16x32xbf16, #tpu.memory_space<vmem>>, vector<1x16x8xbf16>
    %66 = vector.shape_cast %65 : vector<1x16x8xbf16> to vector<16x8xbf16>
    %c0_52 = arith.constant 0 : index
    %c0_53 = arith.constant 0 : index
    %c16_54 = arith.constant 16 : index
    %67 = vector.load %arg5[%c0_52, %c0_53, %c16_54] : memref<1x16x32xbf16, #tpu.memory_space<vmem>>, vector<1x16x8xbf16>
    %68 = vector.shape_cast %67 : vector<1x16x8xbf16> to vector<16x8xbf16>
    %cst_55 = arith.constant dense<0.000000e+00> : vector<8x16xf32>
    %69 = tpu.matmul %64, %66, %cst_55 {dimension_numbers = #tpu.dot_dimension_numbers<[1], [1], [0], [0], [0, 0, 1, 0], [], []>} : vector<8x8xbf16>, vector<16x8xbf16>, vector<8x16xf32> -> vector<8x16xf32>
    %c0_56 = arith.constant 0 : index
    %c2 = arith.constant 2 : index
    %70 = vector.load %arg9[%c0_56, %c2] : memref<8x4xf32, #tpu.memory_space<vmem>>, vector<8x1xf32>
    %cst_57 = arith.constant dense<0xFF800000> : vector<8xf32>
    %71 = vector.multi_reduction <maximumf>, %69, %cst_57 [1] : vector<8x16xf32> to vector<8xf32>
    %72 = vector.shape_cast %71 : vector<8xf32> to vector<8x1xf32>
    %73 = arith.maximumf %70, %72 : vector<8x1xf32>
    %74 = arith.subf %70, %73 : vector<8x1xf32>
    %75 = math.exp %74 : vector<8x1xf32>
    %76 = vector.broadcast %73 : vector<8x1xf32> to vector<8x16xf32>
    %77 = arith.subf %69, %76 : vector<8x16xf32>
    %78 = math.exp %77 : vector<8x16xf32>
    %c0_58 = arith.constant 0 : index
    %c2_59 = arith.constant 2 : index
    %79 = vector.load %arg10[%c0_58, %c2_59] : memref<8x4xf32, #tpu.memory_space<vmem>>, vector<8x1xf32>
    %80 = arith.mulf %75, %79 : vector<8x1xf32>
    %cst_60 = arith.constant dense<0.000000e+00> : vector<8xf32>
    %81 = vector.multi_reduction <add>, %78, %cst_60 [1] : vector<8x16xf32> to vector<8xf32>
    %82 = vector.shape_cast %81 : vector<8xf32> to vector<8x1xf32>
    %83 = arith.addf %80, %82 : vector<8x1xf32>
    %c0_61 = arith.constant 0 : index
    %c2_62 = arith.constant 2 : index
    %84 = vector.load %arg10[%c0_61, %c2_62] : memref<8x4xf32, #tpu.memory_space<vmem>>, vector<8x1xf32>
    tpu.vector_store %arg10[%c0_61, %c2_62], %83 {strides = array<i32>} : memref<8x4xf32, #tpu.memory_space<vmem>>, vector<8x1xf32>,
    %85 = arith.truncf %78 : vector<8x16xf32> to vector<8x16xbf16>
    %cst_63 = arith.constant dense<0.000000e+00> : vector<8x8xf32>
    %86 = tpu.matmul %85, %68, %cst_63 {dimension_numbers = #tpu.dot_dimension_numbers<[1], [0], [0], [1], [0, 0, 1, 1], [], []>} : vector<8x16xbf16>, vector<16x8xbf16>, vector<8x8xf32> -> vector<8x8xf32>
    %c0_64 = arith.constant 0 : index
    %c16_65 = arith.constant 16 : index
    %87 = vector.load %arg11[%c0_64, %c16_65] : memref<8x32xf32, #tpu.memory_space<vmem>>, vector<8x8xf32>
    %88 = vector.broadcast %75 : vector<8x1xf32> to vector<8x8xf32>
    %89 = arith.mulf %88, %87 : vector<8x8xf32>
    %90 = arith.addf %89, %86 : vector<8x8xf32>
    %c0_66 = arith.constant 0 : index
    %c16_67 = arith.constant 16 : index
    %91 = vector.load %arg11[%c0_66, %c16_67] : memref<8x32xf32, #tpu.memory_space<vmem>>, vector<8x8xf32>
    tpu.vector_store %arg11[%c0_66, %c16_67], %90 {strides = array<i32>} : memref<8x32xf32, #tpu.memory_space<vmem>>, vector<8x8xf32>,
    %c0_68 = arith.constant 0 : index
    %c2_69 = arith.constant 2 : index
    %92 = vector.load %arg9[%c0_68, %c2_69] : memref<8x4xf32, #tpu.memory_space<vmem>>, vector<8x1xf32>
    tpu.vector_store %arg9[%c0_68, %c2_69], %73 {strides = array<i32>} : memref<8x4xf32, #tpu.memory_space<vmem>>, vector<8x1xf32>,
    %c0_70 = arith.constant 0 : index
    %c0_71 = arith.constant 0 : index
    %c24 = arith.constant 24 : index
    %93 = vector.load %arg3[%c0_70, %c0_71, %c24] : memref<1x8x32xbf16, #tpu.memory_space<vmem>>, vector<1x8x8xbf16>
    %94 = vector.shape_cast %93 : vector<1x8x8xbf16> to vector<8x8xbf16>
    %c0_72 = arith.constant 0 : index
    %c0_73 = arith.constant 0 : index
    %c24_74 = arith.constant 24 : index
    %95 = vector.load %arg4[%c0_72, %c0_73, %c24_74] : memref<1x16x32xbf16, #tpu.memory_space<vmem>>, vector<1x16x8xbf16>
    %96 = vector.shape_cast %95 : vector<1x16x8xbf16> to vector<16x8xbf16>
    %c0_75 = arith.constant 0 : index
    %c0_76 = arith.constant 0 : index
    %c24_77 = arith.constant 24 : index
    %97 = vector.load %arg5[%c0_75, %c0_76, %c24_77] : memref<1x16x32xbf16, #tpu.memory_space<vmem>>, vector<1x16x8xbf16>
    %98 = vector.shape_cast %97 : vector<1x16x8xbf16> to vector<16x8xbf16>
    %cst_78 = arith.constant dense<0.000000e+00> : vector<8x16xf32>
    %99 = tpu.matmul %94, %96, %cst_78 {dimension_numbers = #tpu.dot_dimension_numbers<[1], [1], [0], [0], [0, 0, 1, 0], [], []>} : vector<8x8xbf16>, vector<16x8xbf16>, vector<8x16xf32> -> vector<8x16xf32>
    %c0_79 = arith.constant 0 : index
    %c3 = arith.constant 3 : index
    %100 = vector.load %arg9[%c0_79, %c3] : memref<8x4xf32, #tpu.memory_space<vmem>>, vector<8x1xf32>
    %cst_80 = arith.constant dense<0xFF800000> : vector<8xf32>
    %101 = vector.multi_reduction <maximumf>, %99, %cst_80 [1] : vector<8x16xf32> to vector<8xf32>
    %102 = vector.shape_cast %101 : vector<8xf32> to vector<8x1xf32>
    %103 = arith.maximumf %100, %102 : vector<8x1xf32>
    %104 = arith.subf %100, %103 : vector<8x1xf32>
    %105 = math.exp %104 : vector<8x1xf32>
    %106 = vector.broadcast %103 : vector<8x1xf32> to vector<8x16xf32>
    %107 = arith.subf %99, %106 : vector<8x16xf32>
    %108 = math.exp %107 : vector<8x16xf32>
    %c0_81 = arith.constant 0 : index
    %c3_82 = arith.constant 3 : index
    %109 = vector.load %arg10[%c0_81, %c3_82] : memref<8x4xf32, #tpu.memory_space<vmem>>, vector<8x1xf32>
    %110 = arith.mulf %105, %109 : vector<8x1xf32>
    %cst_83 = arith.constant dense<0.000000e+00> : vector<8xf32>
    %111 = vector.multi_reduction <add>, %108, %cst_83 [1] : vector<8x16xf32> to vector<8xf32>
    %112 = vector.shape_cast %111 : vector<8xf32> to vector<8x1xf32>
    %113 = arith.addf %110, %112 : vector<8x1xf32>
    %c0_84 = arith.constant 0 : index
    %c3_85 = arith.constant 3 : index
    %114 = vector.load %arg10[%c0_84, %c3_85] : memref<8x4xf32, #tpu.memory_space<vmem>>, vector<8x1xf32>
    tpu.vector_store %arg10[%c0_84, %c3_85], %113 {strides = array<i32>} : memref<8x4xf32, #tpu.memory_space<vmem>>, vector<8x1xf32>,
    %115 = arith.truncf %108 : vector<8x16xf32> to vector<8x16xbf16>
    %cst_86 = arith.constant dense<0.000000e+00> : vector<8x8xf32>
    %116 = tpu.matmul %115, %98, %cst_86 {dimension_numbers = #tpu.dot_dimension_numbers<[1], [0], [0], [1], [0, 0, 1, 1], [], []>} : vector<8x16xbf16>, vector<16x8xbf16>, vector<8x8xf32> -> vector<8x8xf32>
    %c0_87 = arith.constant 0 : index
    %c24_88 = arith.constant 24 : index
    %117 = vector.load %arg11[%c0_87, %c24_88] : memref<8x32xf32, #tpu.memory_space<vmem>>, vector<8x8xf32>
    %118 = vector.broadcast %105 : vector<8x1xf32> to vector<8x8xf32>
    %119 = arith.mulf %118, %117 : vector<8x8xf32>
    %120 = arith.addf %119, %116 : vector<8x8xf32>
    %c0_89 = arith.constant 0 : index
    %c24_90 = arith.constant 24 : index
    %121 = vector.load %arg11[%c0_89, %c24_90] : memref<8x32xf32, #tpu.memory_space<vmem>>, vector<8x8xf32>
    tpu.vector_store %arg11[%c0_89, %c24_90], %120 {strides = array<i32>} : memref<8x32xf32, #tpu.memory_space<vmem>>, vector<8x8xf32>,
    %c0_91 = arith.constant 0 : index
    %c3_92 = arith.constant 3 : index
    %122 = vector.load %arg9[%c0_91, %c3_92] : memref<8x4xf32, #tpu.memory_space<vmem>>, vector<8x1xf32>
    tpu.vector_store %arg9[%c0_91, %c3_92], %103 {strides = array<i32>} : memref<8x4xf32, #tpu.memory_space<vmem>>, vector<8x1xf32>,
    %c0_i32_93 = arith.constant 0 : i32
    %123 = arith.cmpi eq, %arg2, %c0_i32_93 : i32
    %124 = arith.extui %123 : i1 to i32
    %c0_i32_94 = arith.constant 0 : i32
    %125 = arith.cmpi ne, %124, %c0_i32_94 : i32
    scf.if %125 {
      %c0_95 = arith.constant 0 : index
      %c0_96 = arith.constant 0 : index
      %126 = vector.load %arg10[%c0_95, %c0_96] : memref<8x4xf32, #tpu.memory_space<vmem>>, vector<8x1xf32>
      %127 = tpu.reciprocal %126 {approx = true} : vector<8x1xf32> -> vector<8x1xf32>
      %c0_97 = arith.constant 0 : index
      %c0_98 = arith.constant 0 : index
      %128 = vector.load %arg11[%c0_97, %c0_98] : memref<8x32xf32, #tpu.memory_space<vmem>>, vector<8x8xf32>
      %129 = vector.broadcast %127 : vector<8x1xf32> to vector<8x8xf32>
      %130 = arith.mulf %128, %129 : vector<8x8xf32>
      %c0_99 = arith.constant 0 : index
      %c0_100 = arith.constant 0 : index
      %131 = vector.load %arg11[%c0_99, %c0_100] : memref<8x32xf32, #tpu.memory_space<vmem>>, vector<8x8xf32>
      tpu.vector_store %arg11[%c0_99, %c0_100], %130 {strides = array<i32>} : memref<8x32xf32, #tpu.memory_space<vmem>>, vector<8x8xf32>,
      %c0_101 = arith.constant 0 : index
      %c1_102 = arith.constant 1 : index
      %132 = vector.load %arg10[%c0_101, %c1_102] : memref<8x4xf32, #tpu.memory_space<vmem>>, vector<8x1xf32>
      %133 = tpu.reciprocal %132 {approx = true} : vector<8x1xf32> -> vector<8x1xf32>
      %c0_103 = arith.constant 0 : index
      %c8_104 = arith.constant 8 : index
      %134 = vector.load %arg11[%c0_103, %c8_104] : memref<8x32xf32, #tpu.memory_space<vmem>>, vector<8x8xf32>
      %135 = vector.broadcast %133 : vector<8x1xf32> to vector<8x8xf32>
      %136 = arith.mulf %134, %135 : vector<8x8xf32>
      %c0_105 = arith.constant 0 : index
      %c8_106 = arith.constant 8 : index
      %137 = vector.load %arg11[%c0_105, %c8_106] : memref<8x32xf32, #tpu.memory_space<vmem>>, vector<8x8xf32>
      tpu.vector_store %arg11[%c0_105, %c8_106], %136 {strides = array<i32>} : memref<8x32xf32, #tpu.memory_space<vmem>>, vector<8x8xf32>,
      %c0_107 = arith.constant 0 : index
      %c2_108 = arith.constant 2 : index
      %138 = vector.load %arg10[%c0_107, %c2_108] : memref<8x4xf32, #tpu.memory_space<vmem>>, vector<8x1xf32>
      %139 = tpu.reciprocal %138 {approx = true} : vector<8x1xf32> -> vector<8x1xf32>
      %c0_109 = arith.constant 0 : index
      %c16_110 = arith.constant 16 : index
      %140 = vector.load %arg11[%c0_109, %c16_110] : memref<8x32xf32, #tpu.memory_space<vmem>>, vector<8x8xf32>
      %141 = vector.broadcast %139 : vector<8x1xf32> to vector<8x8xf32>
      %142 = arith.mulf %140, %141 : vector<8x8xf32>
      %c0_111 = arith.constant 0 : index
      %c16_112 = arith.constant 16 : index
      %143 = vector.load %arg11[%c0_111, %c16_112] : memref<8x32xf32, #tpu.memory_space<vmem>>, vector<8x8xf32>
      tpu.vector_store %arg11[%c0_111, %c16_112], %142 {strides = array<i32>} : memref<8x32xf32, #tpu.memory_space<vmem>>, vector<8x8xf32>,
      %c0_113 = arith.constant 0 : index
      %c3_114 = arith.constant 3 : index
      %144 = vector.load %arg10[%c0_113, %c3_114] : memref<8x4xf32, #tpu.memory_space<vmem>>, vector<8x1xf32>
      %145 = tpu.reciprocal %144 {approx = true} : vector<8x1xf32> -> vector<8x1xf32>
      %c0_115 = arith.constant 0 : index
      %c24_116 = arith.constant 24 : index
      %146 = vector.load %arg11[%c0_115, %c24_116] : memref<8x32xf32, #tpu.memory_space<vmem>>, vector<8x8xf32>
      %147 = vector.broadcast %145 : vector<8x1xf32> to vector<8x8xf32>
      %148 = arith.mulf %146, %147 : vector<8x8xf32>
      %c0_117 = arith.constant 0 : index
      %c24_118 = arith.constant 24 : index
      %149 = vector.load %arg11[%c0_117, %c24_118] : memref<8x32xf32, #tpu.memory_space<vmem>>, vector<8x8xf32>
      tpu.vector_store %arg11[%c0_117, %c24_118], %148 {strides = array<i32>} : memref<8x32xf32, #tpu.memory_space<vmem>>, vector<8x8xf32>,
      %c0_119 = arith.constant 0 : index
      %c0_120 = arith.constant 0 : index
      %150 = vector.load %arg11[%c0_119, %c0_120] : memref<8x32xf32, #tpu.memory_space<vmem>>, vector<8x32xf32>
      %151 = arith.truncf %150 : vector<8x32xf32> to vector<8x32xbf16>
      %c0_121 = arith.constant 0 : index
      %c0_122 = arith.constant 0 : index
      %152 = vector.load %arg6[%c0_121, %c0_122] : memref<32x32xbf16, #tpu.memory_space<vmem>>, vector<32x32xbf16>
      %cst_123 = arith.constant dense<0.000000e+00> : vector<8x32xf32>
      %153 = tpu.matmul %151, %152, %cst_123 {dimension_numbers = #tpu.dot_dimension_numbers<[1], [0], [0], [1], [0, 0, 1, 1], [], []>} : vector<8x32xbf16>, vector<32x32xbf16>, vector<8x32xf32> -> vector<8x32xf32>
      %c0_124 = arith.constant 0 : index
      %c0_125 = arith.constant 0 : index
      %154 = vector.load %arg7[%c0_124, %c0_125] : memref<1x32xf32, #tpu.memory_space<vmem>>, vector<1x32xf32>
      %155 = vector.broadcast %154 : vector<1x32xf32> to vector<8x32xf32>
      %156 = arith.addf %153, %155 : vector<8x32xf32>
      %c0_126 = arith.constant 0 : index
      %c0_127 = arith.constant 0 : index
      %c0_128 = arith.constant 0 : index
      %157 = vector.load %arg8[%c0_126, %c0_127, %c0_128] : memref<1x8x32xf32, #tpu.memory_space<vmem>>, vector<1x8x32xf32>
      %158 = vector.shape_cast %157 : vector<1x8x32xf32> to vector<8x32xf32>
      %159 = vector.shape_cast %156 : vector<8x32xf32> to vector<1x8x32xf32>
      tpu.vector_store %arg8[%c0_126, %c0_127, %c0_128], %159 {strides = array<i32>} : memref<1x8x32xf32, #tpu.memory_space<vmem>>, vector<1x8x32xf32>,
    } else {
    }
    return
  }
  func.func @transform_0(%arg0: i32, %arg1: i32, %arg2: i32) -> (i32, i32, i32) {
    %c0_i32 = arith.constant 0 : i32
    %c0_i32_0 = arith.constant 0 : i32
    return %arg0, %arg1, %c0_i32 : i32, i32, i32
  }
  func.func @transform_1(%arg0: i32, %arg1: i32, %arg2: i32) -> (i32, i32, i32) {
    %c0_i32 = arith.constant 0 : i32
    %c0_i32_0 = arith.constant 0 : i32
    return %arg0, %arg2, %c0_i32 : i32, i32, i32
  }
  func.func @transform_2(%arg0: i32, %arg1: i32, %arg2: i32) -> (i32, i32, i32) {
    %c0_i32 = arith.constant 0 : i32
    %c0_i32_0 = arith.constant 0 : i32
    return %arg0, %arg2, %c0_i32 : i32, i32, i32
  }
  func.func @transform_3(%arg0: i32, %arg1: i32, %arg2: i32) -> (i32, i32) {
    %c0_i32 = arith.constant 0 : i32
    %c0_i32_0 = arith.constant 0 : i32
    %c0_i32_1 = arith.constant 0 : i32
    return %c0_i32, %c0_i32_0 : i32, i32
  }
  func.func @transform_4(%arg0: i32, %arg1: i32, %arg2: i32) -> (i32, i32) {
    %c0_i32 = arith.constant 0 : i32
    %c0_i32_0 = arith.constant 0 : i32
    %c0_i32_1 = arith.constant 0 : i32
    return %c0_i32, %c0_i32_0 : i32, i32
  }
  func.func @transform_5(%arg0: i32, %arg1: i32, %arg2: i32) -> (i32, i32, i32) {
    %c0_i32 = arith.constant 0 : i32
    %c0_i32_0 = arith.constant 0 : i32
    return %arg0, %arg1, %c0_i32 : i32, i32, i32
  }
}

</mosaic_0001>

<llo_original>
// kernel: tpu_custom_call.1
$region0: #{tpu_custom_call.1}
  #allocation0 [shape = 'u32[]', space=smem, size = 0x4, offset = 0x4, fixed_abs, tag = 'smem constant byte address 0x4 - core index']
  #allocation1 [shape = 'u32[144,128]{1,0:T(1,128)}', space=vmem, size = 0x12000, scoped, tag = 'internal scratch']
  #allocation2 [shape = 'f32[8,4]{1,0:T(8,128)}', space=vmem, size = 0x1000, scoped, tag = 'scratch operand']
  #allocation3 [shape = 'f32[8,4]{1,0:T(8,128)}', space=vmem, size = 0x1000, scoped, tag = 'scratch operand']
  #allocation4 [shape = 'f32[8,32]{1,0:T(8,128)}', space=vmem, size = 0x1000, scoped, tag = 'scratch operand']
  %s0 = inlined_call_operand.hbm [shape: bf16[2,8,32], index: 0, kind: input, shape index: {}]
  %s1 = inlined_call_operand.hbm [shape: bf16[2,16,32], index: 1, kind: input, shape index: {}]
  %s2 = inlined_call_operand.hbm [shape: bf16[2,16,32], index: 2, kind: input, shape index: {}]
  %s3 = inlined_call_operand.hbm [shape: bf16[32,32], index: 3, kind: input, shape index: {}]
  %s4 = inlined_call_operand.vmem [shape: f32[1,32], index: 4, kind: input, shape index: {}]
  %s5 = inlined_call_operand.hbm [shape: f32[2,8,32], index: 5, kind: output, shape index: {}]
  %s6 = sld [smem:[#allocation0]]
  $region77: #{tpu_custom_call.1} parent=0
    _
  %s8 = ssub.s32 1, %s6
  %s9 = scalar_select 0, %s8, %s6
  $region1: #{tpu_custom_call.1} parent=0
    #allocation5 [shape = 'u8[4096]{0}', space=vmem, size = 0x1000, scoped, tag = 'input window, operand 0']
    #allocation6 [shape = 's32[2]{0}', space=sflag, size = 0x8, scoped, tag = 'scoped memory for tpu_custom_call.1']
    #allocation7 [shape = 's32[2]{0}', space=sflag, size = 0x8, scoped, tag = 'scoped memory for tpu_custom_call.1']
    #allocation8 [shape = 'u8[8192]{0}', space=vmem, size = 0x2000, scoped, tag = 'input window, operand 1']
    #allocation9 [shape = 's32[2]{0}', space=sflag, size = 0x8, scoped, tag = 'scoped memory for tpu_custom_call.1']
    #allocation10 [shape = 'u8[8192]{0}', space=vmem, size = 0x2000, scoped, tag = 'input window, operand 2']
    #allocation11 [shape = 'u8[8192]{0}', space=vmem, size = 0x2000, scoped, tag = 'input window, operand 3, single buffered']
    #allocation12 [shape = 's32[1]{0}', space=sflag, size = 0x4, scoped, tag = 'scoped memory for tpu_custom_call.1']
    #allocation13 [shape = 'u8[8192]{0}', space=vmem, size = 0x2000, scoped, tag = 'output window, operand 0']
    %10 = vsyncpa [#allocation6], 0
    %s11 = scalar_lea.sflag [#allocation6], 1
    %12 = vsyncpa %s11, 0
    %13 = vsyncpa [#allocation9], 0
    %s14 = scalar_lea.sflag [#allocation9], 1
    %15 = vsyncpa %s14, 0
    %16 = vsyncpa [#allocation12], 0
    %17 = vsyncpa [#allocation7], 0
    %s18 = scalar_lea.sflag [#allocation7], 1
    %19 = vsyncpa %s18, 0
    loop: start=0, step=1, limit=4
    $region2: #{tpu_custom_call.1} parent=1 // loop_pre_header
      _
    $region3: #{tpu_custom_call.1} parent=1 // loop_header
      %s21 = sphi 0, %s25
      %p22 = scmp.ge.s32.totalorder %s21, 4
      %s28 = sphi 0, %s47
      %s29 = sphi 0, %s43
      %s30 = sphi 0, %s39
      %s31 = sphi 0, %s28
      %s32 = sphi 0, %s29
      %s33 = sphi 0, %s30
      %s34 = sphi 0, %s31
      %s35 = sphi 0, %s32
      %s36 = sphi 0, %s33
      %s52 = sphi 0, %s54
      %s55 = sphi 0, %s52
      %s56 = sphi 0, %s55
      %s72 = sphi 0, %s56
      %s80 = sphi 0, %s82
      %s83 = sphi 0, %s80
      %s84 = sphi 0, %s83
      %s100 = sphi 0, %s84
      %s108 = sphi 0, %s110
      %s111 = sphi 0, %s108
      %s112 = sphi 0, %s111
      %s128 = sphi 0, %s112
      %s132 = sphi 0, %s132
      %s134 = sphi 0, %s132
      %s135 = sphi 0, %s134
      %s149 = sphi 0, %s135
      %s153 = sphi 0, %s153
      %s155 = sphi 0, %s153
      %s156 = sphi 0, %s155
      %s170 = sphi 0, %s156
      %s178 = sphi 0, %s180
      %s181 = sphi 0, %s178
      %s182 = sphi 0, %s181
      %s198 = sphi 0, %s182
    $region4: #{tpu_custom_call.1} parent=1 // loop_header_branch
      %24 = sbr.rel (%p22) target = $region8
    $region5: #{tpu_custom_call.1} parent=1 // loop_body
      %s26 = ssub.s32 %s21, 1
      %s27 = ssub.s32 %s21, 2
      %s37 = sadd.s32 1, %s30
      %p38 = scmp.ge.s32.totalorder %s37, 1
      %s39 = scalar_select %p38, 0, %s37
      %s40 = sadd.s32 1, %s29
      %s41 = scalar_select %p38, %s40, %s29
      %p42 = scmp.ge.s32.totalorder %s41, 1
      %s43 = scalar_select %p42, 0, %s41
      %s44 = sadd.s32 1, %s28
      %s45 = scalar_select %p42, %s44, %s28
      %p46 = scmp.ge.s32.totalorder %s45, 2
      %s47 = scalar_select %p46, 0, %s45
      %s48 = ssub.s32 %s28, %s47
      %s49 = ssub.s32 %s29, %s43
      %s50 = sor.u32 %s48, %s49
      %p51 = scmp.eq.s32.totalorder %s50, 0
      %s53 = sadd.s32 %s52, 1
      %s54 = scalar_select %p51, %s52, %s53
      %p57 = pneg %p51
      %p58 = scmp.eq.s32.totalorder %s21, 1
      %p59 = por %p57, %p58
      %p60 = scmp.ne.s32.totalorder %s52, %s55
      %p61 = scmp.eq.s32.totalorder %s21, 0
      %p62 = por %p60, %p61
      %p63 = scmp.ne.s32.totalorder %s52, %s55
      %p64 = scmp.eq.s32.totalorder %s26, 1
      %p65 = por %p63, %p64
      %p66 = scmp.ne.s32.totalorder %s55, %s56
      %p67 = scmp.eq.s32.totalorder %s26, 0
      %p68 = por %p66, %p67
      %p69 = scmp.ne.s32.totalorder %s55, %s56
      %p70 = scmp.eq.s32.totalorder %s27, 1
      %p71 = por %p69, %p70
      %p73 = scmp.ne.s32.totalorder %s56, %s72
      %p74 = scmp.eq.s32.totalorder %s27, 0
      %p75 = por %p73, %p74
      %s76 = ssub.s32 %s28, %s47
      %s77 = ssub.s32 %s30, %s39
      %s78 = sor.u32 %s76, %s77
      %p79 = scmp.eq.s32.totalorder %s78, 0
      %s81 = sadd.s32 %s80, 1
      %s82 = scalar_select %p79, %s80, %s81
      %p85 = pneg %p79
      %p86 = scmp.eq.s32.totalorder %s21, 1
      %p87 = por %p85, %p86
      %p88 = scmp.ne.s32.totalorder %s80, %s83
      %p89 = scmp.eq.s32.totalorder %s21, 0
      %p90 = por %p88, %p89
      %p91 = scmp.ne.s32.totalorder %s80, %s83
      %p92 = scmp.eq.s32.totalorder %s26, 1
      %p93 = por %p91, %p92
      %p94 = scmp.ne.s32.totalorder %s83, %s84
      %p95 = scmp.eq.s32.totalorder %s26, 0
      %p96 = por %p94, %p95
      %p97 = scmp.ne.s32.totalorder %s83, %s84
      %p98 = scmp.eq.s32.totalorder %s27, 1
      %p99 = por %p97, %p98
      %p101 = scmp.ne.s32.totalorder %s84, %s100
      %p102 = scmp.eq.s32.totalorder %s27, 0
      %p103 = por %p101, %p102
      %s104 = ssub.s32 %s28, %s47
      %s105 = ssub.s32 %s30, %s39
      %s106 = sor.u32 %s104, %s105
      %p107 = scmp.eq.s32.totalorder %s106, 0
      %s109 = sadd.s32 %s108, 1
      %s110 = scalar_select %p107, %s108, %s109
      %p113 = pneg %p107
      %p114 = scmp.eq.s32.totalorder %s21, 1
      %p115 = por %p113, %p114
      %p116 = scmp.ne.s32.totalorder %s108, %s111
      %p117 = scmp.eq.s32.totalorder %s21, 0
      %p118 = por %p116, %p117
      %p119 = scmp.ne.s32.totalorder %s108, %s111
      %p120 = scmp.eq.s32.totalorder %s26, 1
      %p121 = por %p119, %p120
      %p122 = scmp.ne.s32.totalorder %s111, %s112
      %p123 = scmp.eq.s32.totalorder %s26, 0
      %p124 = por %p122, %p123
      %p125 = scmp.ne.s32.totalorder %s111, %s112
      %p126 = scmp.eq.s32.totalorder %s27, 1
      %p127 = por %p125, %p126
      %p129 = scmp.ne.s32.totalorder %s112, %s128
      %p130 = scmp.eq.s32.totalorder %s27, 0
      %p131 = por %p129, %p130
      %s133 = sadd.s32 %s132, 1
      %p136 = scmp.eq.s32.totalorder %s21, 1
      %p137 = scmp.ne.s32.totalorder %s132, %s134
      %p138 = scmp.eq.s32.totalorder %s21, 0
      %p139 = por %p137, %p138
      %p140 = scmp.ne.s32.totalorder %s132, %s134
      %p141 = scmp.eq.s32.totalorder %s26, 1
      %p142 = por %p140, %p141
      %p143 = scmp.ne.s32.totalorder %s134, %s135
      %p144 = scmp.eq.s32.totalorder %s26, 0
      %p145 = por %p143, %p144
      %p146 = scmp.ne.s32.totalorder %s134, %s135
      %p147 = scmp.eq.s32.totalorder %s27, 1
      %p148 = por %p146, %p147
      %p150 = scmp.ne.s32.totalorder %s135, %s149
      %p151 = scmp.eq.s32.totalorder %s27, 0
      %p152 = por %p150, %p151
      %s154 = sadd.s32 %s153, 1
      %p157 = scmp.eq.s32.totalorder %s21, 1
      %p158 = scmp.ne.s32.totalorder %s153, %s155
      %p159 = scmp.eq.s32.totalorder %s21, 0
      %p160 = por %p158, %p159
      %p161 = scmp.ne.s32.totalorder %s153, %s155
      %p162 = scmp.eq.s32.totalorder %s26, 1
      %p163 = por %p161, %p162
      %p164 = scmp.ne.s32.totalorder %s155, %s156
      %p165 = scmp.eq.s32.totalorder %s26, 0
      %p166 = por %p164, %p165
      %p167 = scmp.ne.s32.totalorder %s155, %s156
      %p168 = scmp.eq.s32.totalorder %s27, 1
      %p169 = por %p167, %p168
      %p171 = scmp.ne.s32.totalorder %s156, %s170
      %p172 = scmp.eq.s32.totalorder %s27, 0
      %p173 = por %p171, %p172
      %s174 = ssub.s32 %s28, %s47
      %s175 = ssub.s32 %s29, %s43
      %s176 = sor.u32 %s174, %s175
      %p177 = scmp.eq.s32.totalorder %s176, 0
      %s179 = sadd.s32 %s178, 1
      %s180 = scalar_select %p177, %s178, %s179
      %p183 = pneg %p177
      %p184 = scmp.eq.s32.totalorder %s21, 1
      %p185 = por %p183, %p184
      %p186 = scmp.ne.s32.totalorder %s178, %s181
      %p187 = scmp.eq.s32.totalorder %s21, 0
      %p188 = por %p186, %p187
      %p189 = scmp.ne.s32.totalorder %s178, %s181
      %p190 = scmp.eq.s32.totalorder %s26, 1
      %p191 = por %p189, %p190
      %p192 = scmp.ne.s32.totalorder %s181, %s182
      %p193 = scmp.eq.s32.totalorder %s26, 0
      %p194 = por %p192, %p193
      %p195 = scmp.ne.s32.totalorder %s181, %s182
      %p196 = scmp.eq.s32.totalorder %s27, 1
      %p197 = por %p195, %p196
      %p199 = scmp.ne.s32.totalorder %s182, %s198
      %p200 = scmp.eq.s32.totalorder %s27, 0
      %p201 = por %p199, %p200
      %p202 = scmp.le.s32.totalorder 1, %s21
      %p203 = scmp.lt.s32.totalorder %s21, 3
      %p204 = pnand %p202, %p203
      %p205 = pneg %p204
      // Predicated region
      $region9: #{tpu_custom_call.1} parent=5 // pred_check
        _
      $region10: #{tpu_custom_call.1} parent=5 // pred_check_branch
        %207 = sbr.rel (%p204) target = $region12
      $region11: #{tpu_custom_call.1} parent=5 // pred_region
        %s208 = ssub.s32 %s21, 1
        // Predicated region
        $region13: #{tpu_custom_call.1} parent=11 // pred_check
          %p209 = pneg %p145
        $region14: #{tpu_custom_call.1} parent=11 // pred_check_branch
          %211 = sbr.rel (%p209) target = $region16
        $region15: #{tpu_custom_call.1} parent=11 // pred_region
          %s213 = ssub.s32 256, 256
          %214 = vsyncadd [#allocation12], %s213
          %s215 = sshll.u32 [#allocation11], 4
          %s216 = int_to_ptr.vmem [resolvable:$true] %s215
          %221 = dma.hbm_to_vmem [thread:$0]  %s3, 256, %s216, [#allocation12], 64, 64, 4
        $region16: #{tpu_custom_call.1} parent=11 // pred_fallthru
          _
        // Predicated region
        $region17: #{tpu_custom_call.1} parent=11 // pred_check
          %p222 = pneg %p166
        $region18: #{tpu_custom_call.1} parent=11 // pred_check_branch
          %224 = sbr.rel (%p222) target = $region20
        $region19: #{tpu_custom_call.1} parent=11 // pred_region
          _
        $region20: #{tpu_custom_call.1} parent=11 // pred_fallthru
          _
      $region12: #{tpu_custom_call.1} parent=5 // pred_fallthru
        _
      %p225 = scmp.lt.s32.totalorder %s21, 2
      // Predicated region
      $region21: #{tpu_custom_call.1} parent=5 // pred_check
        %p226 = pneg %p225
      $region22: #{tpu_custom_call.1} parent=5 // pred_check_branch
        %228 = sbr.rel (%p226) target = $region24
      $region23: #{tpu_custom_call.1} parent=5 // pred_region
        // Predicated region
        $region25: #{tpu_custom_call.1} parent=23 // pred_check
          %p229 = pneg %p62
        $region26: #{tpu_custom_call.1} parent=23 // pred_check_branch
          %231 = sbr.rel (%p229) target = $region28
        $region27: #{tpu_custom_call.1} parent=23 // pred_region
          %s232 = sand.u32 %s52, 1
          %s233 = scalar_lea.sflag [#allocation6], %s232
          %s234 = sand.u32 %s52, 1
          %s235 = smul.addr %s234, 4
          %s236 = scalar_lea.vmem [#allocation5], %s235
          %s238 = ssub.s32 64, 64
          %239 = vsyncadd %s233, %s238
          %s240 = sadd.s32 %s29, %s28
          %s241 = smul.addr %s240, 64
          %s242 = scalar_lea.hbm %s0, %s241
          %s244 = sshll.u32 %s236, 4
          %s245 = int_to_ptr.vmem [resolvable:$true] %s244
          %247 = dma.hbm_to_vmem [thread:$0]  %s242, 64, %s245, %s233
        $region28: #{tpu_custom_call.1} parent=23 // pred_fallthru
          _
        // Predicated region
        $region29: #{tpu_custom_call.1} parent=23 // pred_check
          %p248 = pneg %p90
        $region30: #{tpu_custom_call.1} parent=23 // pred_check_branch
          %250 = sbr.rel (%p248) target = $region32
        $region31: #{tpu_custom_call.1} parent=23 // pred_region
          %s251 = sand.u32 %s21, 1
          %s252 = scalar_lea.sflag [#allocation9], %s251
          %s253 = sand.u32 %s80, 1
          %s254 = smul.addr %s253, 8
          %s255 = scalar_lea.vmem [#allocation8], %s254
          %s256 = smul.u32 2, %s30
          %s258 = ssub.s32 128, 128
          %259 = vsyncadd %s252, %s258
          %s260 = smul.addr %s28, 2
          %s261 = sadd.s32 %s256, %s260
          %s262 = smul.addr %s261, 64
          %s263 = scalar_lea.hbm %s1, %s262
          %s264 = sshll.u32 %s255, 4
          %s265 = int_to_ptr.vmem [resolvable:$true] %s264
          %270 = dma.hbm_to_vmem [thread:$0]  %s263, 128, %s265, %s252, 64, 64, 4
        $region32: #{tpu_custom_call.1} parent=23 // pred_fallthru
          _
        // Predicated region
        $region33: #{tpu_custom_call.1} parent=23 // pred_check
          %p271 = pneg %p118
        $region34: #{tpu_custom_call.1} parent=23 // pred_check_branch
          %273 = sbr.rel (%p271) target = $region36
        $region35: #{tpu_custom_call.1} parent=23 // pred_region
          %s274 = sand.u32 %s21, 1
          %s275 = scalar_lea.sflag [#allocation9], %s274
          %s276 = sand.u32 %s108, 1
          %s277 = smul.addr %s276, 8
          %s278 = scalar_lea.vmem [#allocation10], %s277
          %s279 = smul.u32 2, %s30
          %s281 = ssub.s32 128, 128
          %282 = vsyncadd %s275, %s281
          %s283 = smul.addr %s28, 2
          %s284 = sadd.s32 %s279, %s283
          %s285 = smul.addr %s284, 64
          %s286 = scalar_lea.hbm %s2, %s285
          %s287 = sshll.u32 %s278, 4
          %s288 = int_to_ptr.vmem [resolvable:$true] %s287
          %293 = dma.hbm_to_vmem [thread:$0]  %s286, 128, %s288, %s275, 64, 64, 4
        $region36: #{tpu_custom_call.1} parent=23 // pred_fallthru
          _
      $region24: #{tpu_custom_call.1} parent=5 // pred_fallthru
        _
      %p294 = scmp.le.s32.totalorder 1, %s21
      %p295 = scmp.lt.s32.totalorder %s21, 3
      %p296 = pnand %p294, %p295
      %p297 = pneg %p296
      // Predicated region
      $region37: #{tpu_custom_call.1} parent=5 // pred_check
        _
      $region38: #{tpu_custom_call.1} parent=5 // pred_check_branch
        %299 = sbr.rel (%p296) target = $region40
      $region39: #{tpu_custom_call.1} parent=5 // pred_region
        %s300 = ssub.s32 %s21, 1
        %s301 = sand.u32 %s55, 1
        %s302 = scalar_lea.sflag [#allocation6], %s301
        %s303 = sand.u32 %s55, 1
        %s304 = smul.addr %s303, 4
        %s305 = scalar_lea.vmem [#allocation5], %s304
        // Predicated region
        $region41: #{tpu_custom_call.1} parent=39 // pred_check
          %p306 = pneg %p68
        $region42: #{tpu_custom_call.1} parent=39 // pred_check_branch
          %308 = sbr.rel (%p306) target = $region44
        $region43: #{tpu_custom_call.1} parent=39 // pred_region
          %309 = dma.done %s302, 64
        $region44: #{tpu_custom_call.1} parent=39 // pred_fallthru
          _
        %s310 = sand.u32 %s26, 1
        %s311 = scalar_lea.sflag [#allocation9], %s310
        %s312 = sand.u32 %s83, 1
        %s313 = smul.addr %s312, 8
        %s314 = scalar_lea.vmem [#allocation8], %s313
        // Predicated region
        $region45: #{tpu_custom_call.1} parent=39 // pred_check
          %p315 = pneg %p96
        $region46: #{tpu_custom_call.1} parent=39 // pred_check_branch
          %317 = sbr.rel (%p315) target = $region48
        $region47: #{tpu_custom_call.1} parent=39 // pred_region
          %318 = dma.done %s311, 128
        $region48: #{tpu_custom_call.1} parent=39 // pred_fallthru
          _
        %s319 = sand.u32 %s26, 1
        %s320 = scalar_lea.sflag [#allocation9], %s319
        %s321 = sand.u32 %s111, 1
        %s322 = smul.addr %s321, 8
        %s323 = scalar_lea.vmem [#allocation10], %s322
        // Predicated region
        $region49: #{tpu_custom_call.1} parent=39 // pred_check
          %p324 = pneg %p124
        $region50: #{tpu_custom_call.1} parent=39 // pred_check_branch
          %326 = sbr.rel (%p324) target = $region52
        $region51: #{tpu_custom_call.1} parent=39 // pred_region
          %327 = dma.done %s320, 128
        $region52: #{tpu_custom_call.1} parent=39 // pred_fallthru
          _
        // Predicated region
        $region53: #{tpu_custom_call.1} parent=39 // pred_check
          %p328 = pneg %p145
        $region54: #{tpu_custom_call.1} parent=39 // pred_check_branch
          %330 = sbr.rel (%p328) target = $region56
        $region55: #{tpu_custom_call.1} parent=39 // pred_region
          %331 = dma.done [#allocation12], 256
        $region56: #{tpu_custom_call.1} parent=39 // pred_fallthru
          _
        %s332 = sand.u32 %s55, 1
        %s333 = scalar_lea.sflag [#allocation6], %s332
        %s334 = sand.u32 %s55, 1
        %s335 = smul.addr %s334, 4
        %s336 = scalar_lea.vmem [#allocation5], %s335
        %p337 = pneg %p68
        %p338 = pneg %p65
        %s339 = sand.u32 %s26, 1
        %s340 = scalar_lea.sflag [#allocation9], %s339
        %s341 = sand.u32 %s83, 1
        %s342 = smul.addr %s341, 8
        %s343 = scalar_lea.vmem [#allocation8], %s342
        %p344 = pneg %p96
        %p345 = pneg %p93
        %s346 = sand.u32 %s26, 1
        %s347 = scalar_lea.sflag [#allocation9], %s346
        %s348 = sand.u32 %s111, 1
        %s349 = smul.addr %s348, 8
        %s350 = scalar_lea.vmem [#allocation10], %s349
        %p351 = pneg %p124
        %p352 = pneg %p121
        %p353 = pneg %p145
        %p354 = pneg %p142
        %p355 = pneg %p166
        %p356 = pneg %p163
        %p357 = pneg %p194
        %p358 = pneg %p191
        %s359 = sand.u32 %s181, 1
        %s360 = scalar_lea.sflag [#allocation7], %s359
        %s361 = sand.u32 %s181, 1
        %s362 = smul.addr %s361, 8
        %s363 = scalar_lea.vmem [#allocation13], %s362
        %s364 = smul.u32 2, %s33
        %s365 = smul.u32 2, %s33
        %p367 = scmp.eq.s32.totalorder %s33, 0
        // Predicated region
        $region57: #{tpu_custom_call.1} parent=39 // pred_check
          %p368 = pneg %p367
        $region58: #{tpu_custom_call.1} parent=39 // pred_check_branch
          %370 = sbr.rel (%p368) target = $region60
        $region59: #{tpu_custom_call.1} parent=39 // pred_region
          %vm371 = vcmask 31744
          %372 = vst.msk [vmem:[#allocation2] sm:$0xff] %vm371, -inf
          %373 = vst.msk [vmem:[#allocation3] sm:$0xff] %vm371, 0.0
          %vm374 = vcmask 261120
          %375 = vst.msk [vmem:[#allocation4] sm:$0xff] %vm374, 0.0
        $region60: #{tpu_custom_call.1} parent=39 // pred_fallthru
          _
        %v376 = vld [vmem:[%s305] sm:$0xf]
        %v377 = vld [vmem:[%s314] sm:$0xf]
        %v378 = vld [vmem:[%s314 + $0x4] sm:$0xf]
        %v379 = vld [vmem:[%s323] sm:$0xf]
        %v380 = vld [vmem:[%s323 + $0x4] sm:$0xf]
        %v383 = vunpack.c.l.b16 %v377
        %v384 = vunpack.c.l.b16 %v378
        %v385 = vpack.c.b16 %v384, %v383
        %vm386 = vcmask 64512
        %v388 = vsel %vm386, %v376, 0
        %v391 = vsel %vm386, %v385, 0
        %393 = vmatprep.subr.bf16.mxu0 0
        %394 = vmatpush1.bf16.xpose.msra.mxu0 %v391
        %395 = vmatprep.subr.bf16.mxu0 0
        %396 = vmatpush1.bf16.xpose.msra.mxu0 0
        %397 = vmatprep.subr.bf16.mxu0 0
        %398 = vmatpush1.bf16.xpose.msra.mxu0 0
        %399 = vmatprep.subr.bf16.mxu0 0
        %400 = vmatpush1.bf16.xpose.msra.mxu0 0
        %401 = vmatprep.subr.bf16.mxu0 0
        %402 = vmatpush1.bf16.xpose.msra.mxu0 0
        %403 = vmatprep.subr.bf16.mxu0 0
        %404 = vmatpush1.bf16.xpose.msra.mxu0 0
        %405 = vmatprep.subr.bf16.mxu0 0
        %406 = vmatpush1.bf16.xpose.msra.mxu0 0
        %407 = vmatprep.subr.bf16.mxu0 0
        %408 = vmatpush1.bf16.xpose.msra.mxu0 0
        %409 = vmatprep.subr.bf16.mxu0 0
        %410 = vmatpush1.bf16.xpose.msra.mxu0 0
        %411 = vmatprep.subr.bf16.mxu0 0
        %412 = vmatpush1.bf16.xpose.msra.mxu0 0
        %413 = vmatprep.subr.bf16.mxu0 0
        %414 = vmatpush1.bf16.xpose.msra.mxu0 0
        %415 = vmatprep.subr.bf16.mxu0 0
        %416 = vmatpush1.bf16.xpose.msra.mxu0 0
        %417 = vmatprep.subr.bf16.mxu0 0
        %418 = vmatpush1.bf16.xpose.msra.mxu0 0
        %419 = vmatprep.subr.bf16.mxu0 0
        %420 = vmatpush1.bf16.xpose.msra.mxu0 0
        %421 = vmatprep.subr.bf16.mxu0 0
        %422 = vmatpush1.bf16.xpose.msra.mxu0 0
        %423 = vmatprep.subr.bf16.mxu0 0
        %424 = vmatpush1.bf16.xpose.msra.mxu0 0
        %425 = vmatprep.mubr.bf16.mxu0 0
        %426 = vmatmul.mubr.bf16.gmra.mrb[0].mxu0 %v388
        %v427 = vpop.f32.mrb[0].mxu0
        %v428 = vadd.f32 0.0, %v427
        %v429 = vpop.f32.mrb[0].mxu0
        %v430 = vpop.f32.mrb[0].mxu0
        %v431 = vpop.f32.mrb[0].mxu0
        %432 = vdwg.mxu0
        %v433 = vld [vmem:[#allocation2] sm:$0xff]
        %vm434 = vcmask 130048
        %v435 = vsel %vm434, %v428, -inf
        %436 = vmax.xlane.f32.xlu0 %v435
        %v437 = vpop.xlane.xlu0 %436
        %v438 = vmax.f32 %v433, %v437
        %v439 = vsub.f32 %v433, %v438
        %v440 = vmul.f32 %v439, 1.442695
        %v441 = vpow.pop %v440
        %443 = vset.pattern.permute.xlu0 0
        %444 = vperm.xlu0 %443, %v438
        %v445 = vpop.permute.xlu0 %444
        %v447 = vsub.f32 %v428, %v445
        %v448 = vmul.f32 %v447, 1.442695
        %v449 = vpow.pop %v448
        %v450 = vld [vmem:[#allocation3] sm:$0xff]
        %v451 = vmul.f32 %v441, %v450
        %v452 = vsel %vm434, %v449, 0.0
        %453 = vadd.xlane.f32.xlu0 %v452
        %v454 = vpop.xlane.xlu0 %453
        %v455 = vadd.f32 %v451, %v454
        %vm456 = vcmask 7168
        %457 = vst.msk [vmem:[#allocation3] sm:$0xff] %vm456, %v455
        %v458 = vpack.c.bf16 %v449, %v449
        %v461 = vunpack.c.l.b16 %v379
        %v462 = vunpack.c.l.b16 %v380
        %v463 = vpack.c.b16 %v462, %v461
        %v466 = vsel %vm434, %v458, 0
        %468 = vmatprep.subr.bf16.mxu0 0
        %469 = vmatpush1.bf16.msra.mxu0 %v463
        %470 = vmatprep.subr.bf16.mxu0 0
        %471 = vmatpush1.bf16.msra.mxu0 0
        %472 = vmatprep.subr.bf16.mxu0 0
        %473 = vmatpush1.bf16.msra.mxu0 0
        %474 = vmatprep.subr.bf16.mxu0 0
        %475 = vmatpush1.bf16.msra.mxu0 0
        %476 = vmatprep.subr.bf16.mxu0 0
        %477 = vmatpush1.bf16.msra.mxu0 0
        %478 = vmatprep.subr.bf16.mxu0 0
        %479 = vmatpush1.bf16.msra.mxu0 0
        %480 = vmatprep.subr.bf16.mxu0 0
        %481 = vmatpush1.bf16.msra.mxu0 0
        %482 = vmatprep.subr.bf16.mxu0 0
        %483 = vmatpush1.bf16.msra.mxu0 0
        %484 = vmatprep.subr.bf16.mxu0 0
        %485 = vmatpush1.bf16.msra.mxu0 0
        %486 = vmatprep.subr.bf16.mxu0 0
        %487 = vmatpush1.bf16.msra.mxu0 0
        %488 = vmatprep.subr.bf16.mxu0 0
        %489 = vmatpush1.bf16.msra.mxu0 0
        %490 = vmatprep.subr.bf16.mxu0 0
        %491 = vmatpush1.bf16.msra.mxu0 0
        %492 = vmatprep.subr.bf16.mxu0 0
        %493 = vmatpush1.bf16.msra.mxu0 0
        %494 = vmatprep.subr.bf16.mxu0 0
        %495 = vmatpush1.bf16.msra.mxu0 0
        %496 = vmatprep.subr.bf16.mxu0 0
        %497 = vmatpush1.bf16.msra.mxu0 0
        %498 = vmatprep.subr.bf16.mxu0 0
        %499 = vmatpush1.bf16.msra.mxu0 0
        %500 = vmatprep.mubr.bf16.mxu0 0
        %501 = vmatmul.mubr.bf16.gmra.mrb[0].mxu0 %v466
        %v502 = vpop.f32.mrb[0].mxu0
        %v503 = vadd.f32 0.0, %v502
        %v504 = vpop.f32.mrb[0].mxu0
        %v505 = vpop.f32.mrb[0].mxu0
        %v506 = vpop.f32.mrb[0].mxu0
        %507 = vdwg.mxu0
        %v508 = vld [vmem:[#allocation4] sm:$0xff]
        %510 = vset.pattern.permute.xlu0 0
        %511 = vperm.xlu0 %510, %v441
        %v512 = vpop.permute.xlu0 %511
        %v514 = vmul.f32 %v512, %v508
        %v515 = vadd.f32 %v514, %v503
        %516 = vst.msk [vmem:[#allocation4] sm:$0xff] %vm386, %v515
        %517 = vst.msk [vmem:[#allocation2] sm:$0xff] %vm456, %v438
        %v518 = vld [vmem:[%s305] sm:$0xf]
        %v519 = vld [vmem:[%s314] sm:$0xf]
        %v520 = vld [vmem:[%s314 + $0x4] sm:$0xf]
        %v521 = vld [vmem:[%s323] sm:$0xf]
        %v522 = vld [vmem:[%s323 + $0x4] sm:$0xf]
        %v524 = vunpack.c.l.b16 %v518
        %v525 = vpack.c.b16 %v524, %v524
        %526 = vrot.lane.b32.xlu0 %v525, 120
        %v527 = vpop.permute.xlu0 %526
        %v530 = vunpack.c.l.b16 %v519
        %v531 = vunpack.c.l.b16 %v520
        %v532 = vpack.c.b16 %v531, %v530
        %533 = vrot.lane.b32.xlu0 %v532, 120
        %v534 = vpop.permute.xlu0 %533
        %v536 = vsel %vm386, %v527, 0
        %v539 = vsel %vm386, %v534, 0
        %541 = vmatprep.subr.bf16.mxu0 0
        %542 = vmatpush1.bf16.xpose.msra.mxu0 %v539
        %543 = vmatprep.subr.bf16.mxu0 0
        %544 = vmatpush1.bf16.xpose.msra.mxu0 0
        %545 = vmatprep.subr.bf16.mxu0 0
        %546 = vmatpush1.bf16.xpose.msra.mxu0 0
        %547 = vmatprep.subr.bf16.mxu0 0
        %548 = vmatpush1.bf16.xpose.msra.mxu0 0
        %549 = vmatprep.subr.bf16.mxu0 0
        %550 = vmatpush1.bf16.xpose.msra.mxu0 0
        %551 = vmatprep.subr.bf16.mxu0 0
        %552 = vmatpush1.bf16.xpose.msra.mxu0 0
        %553 = vmatprep.subr.bf16.mxu0 0
        %554 = vmatpush1.bf16.xpose.msra.mxu0 0
        %555 = vmatprep.subr.bf16.mxu0 0
        %556 = vmatpush1.bf16.xpose.msra.mxu0 0
        %557 = vmatprep.subr.bf16.mxu0 0
        %558 = vmatpush1.bf16.xpose.msra.mxu0 0
        %559 = vmatprep.subr.bf16.mxu0 0
        %560 = vmatpush1.bf16.xpose.msra.mxu0 0
        %561 = vmatprep.subr.bf16.mxu0 0
        %562 = vmatpush1.bf16.xpose.msra.mxu0 0
        %563 = vmatprep.subr.bf16.mxu0 0
        %564 = vmatpush1.bf16.xpose.msra.mxu0 0
        %565 = vmatprep.subr.bf16.mxu0 0
        %566 = vmatpush1.bf16.xpose.msra.mxu0 0
        %567 = vmatprep.subr.bf16.mxu0 0
        %568 = vmatpush1.bf16.xpose.msra.mxu0 0
        %569 = vmatprep.subr.bf16.mxu0 0
        %570 = vmatpush1.bf16.xpose.msra.mxu0 0
        %571 = vmatprep.subr.bf16.mxu0 0
        %572 = vmatpush1.bf16.xpose.msra.mxu0 0
        %573 = vmatprep.mubr.bf16.mxu0 0
        %574 = vmatmul.mubr.bf16.gmra.mrb[0].mxu0 %v536
        %v575 = vpop.f32.mrb[0].mxu0
        %v576 = vadd.f32 0.0, %v575
        %v577 = vpop.f32.mrb[0].mxu0
        %v578 = vpop.f32.mrb[0].mxu0
        %v579 = vpop.f32.mrb[0].mxu0
        %580 = vdwg.mxu0
        %v581 = vld [vmem:[#allocation2] sm:$0xff]
        %v582 = vsel %vm434, %v576, -inf
        %583 = vmax.xlane.f32.xlu0 %v582
        %v584 = vpop.xlane.xlu0 %583
        %v585 = vmax.f32 %v581, %v584
        %v586 = vsub.f32 %v581, %v585
        %v587 = vmul.f32 %v586, 1.442695
        %v588 = vpow.pop %v587
        %590 = vset.pattern.permute.xlu0 1
        %591 = vperm.xlu0 %590, %v585
        %v592 = vpop.permute.xlu0 %591
        %v594 = vsub.f32 %v576, %v592
        %v595 = vmul.f32 %v594, 1.442695
        %v596 = vpow.pop %v595
        %v597 = vld [vmem:[#allocation3] sm:$0xff]
        %v598 = vmul.f32 %v588, %v597
        %v599 = vsel %vm434, %v596, 0.0
        %600 = vadd.xlane.f32.xlu0 %v599
        %v601 = vpop.xlane.xlu0 %600
        %v602 = vadd.f32 %v598, %v601
        %vm603 = vcmask 15368
        %604 = vst.msk [vmem:[#allocation3] sm:$0xff] %vm603, %v602
        %v605 = vpack.c.bf16 %v596, %v596
        %v608 = vunpack.c.l.b16 %v521
        %v609 = vunpack.c.l.b16 %v522
        %v610 = vpack.c.b16 %v609, %v608
        %611 = vrot.lane.b32.xlu0 %v610, 120
        %v612 = vpop.permute.xlu0 %611
        %v615 = vsel %vm434, %v605, 0
        %617 = vmatprep.subr.bf16.mxu0 0
        %618 = vmatpush1.bf16.msra.mxu0 %v612
        %619 = vmatprep.subr.bf16.mxu0 0
        %620 = vmatpush1.bf16.msra.mxu0 0
        %621 = vmatprep.subr.bf16.mxu0 0
        %622 = vmatpush1.bf16.msra.mxu0 0
        %623 = vmatprep.subr.bf16.mxu0 0
        %624 = vmatpush1.bf16.msra.mxu0 0
        %625 = vmatprep.subr.bf16.mxu0 0
        %626 = vmatpush1.bf16.msra.mxu0 0
        %627 = vmatprep.subr.bf16.mxu0 0
        %628 = vmatpush1.bf16.msra.mxu0 0
        %629 = vmatprep.subr.bf16.mxu0 0
        %630 = vmatpush1.bf16.msra.mxu0 0
        %631 = vmatprep.subr.bf16.mxu0 0
        %632 = vmatpush1.bf16.msra.mxu0 0
        %633 = vmatprep.subr.bf16.mxu0 0
        %634 = vmatpush1.bf16.msra.mxu0 0
        %635 = vmatprep.subr.bf16.mxu0 0
        %636 = vmatpush1.bf16.msra.mxu0 0
        %637 = vmatprep.subr.bf16.mxu0 0
        %638 = vmatpush1.bf16.msra.mxu0 0
        %639 = vmatprep.subr.bf16.mxu0 0
        %640 = vmatpush1.bf16.msra.mxu0 0
        %641 = vmatprep.subr.bf16.mxu0 0
        %642 = vmatpush1.bf16.msra.mxu0 0
        %643 = vmatprep.subr.bf16.mxu0 0
        %644 = vmatpush1.bf16.msra.mxu0 0
        %645 = vmatprep.subr.bf16.mxu0 0
        %646 = vmatpush1.bf16.msra.mxu0 0
        %647 = vmatprep.subr.bf16.mxu0 0
        %648 = vmatpush1.bf16.msra.mxu0 0
        %649 = vmatprep.mubr.bf16.mxu0 0
        %650 = vmatmul.mubr.bf16.gmra.mrb[0].mxu0 %v615
        %v651 = vpop.f32.mrb[0].mxu0
        %v652 = vadd.f32 0.0, %v651
        %v653 = vpop.f32.mrb[0].mxu0
        %v654 = vpop.f32.mrb[0].mxu0
        %v655 = vpop.f32.mrb[0].mxu0
        %656 = vdwg.mxu0
        %v657 = vld [vmem:[#allocation4] sm:$0xff]
        %659 = vset.pattern.permute.xlu0 1
        %660 = vperm.xlu0 %659, %v588
        %v661 = vpop.permute.xlu0 %660
        %v663 = vmul.f32 %v661, %v657
        %665 = vrot.lane.b32.xlu0 %v652, 8
        %v666 = vpop.permute.xlu0 %665
        %v668 = vadd.f32 %v663, %v666
        %vm669 = vcmask 130112
        %670 = vst.msk [vmem:[#allocation4] sm:$0xff] %vm669, %v668
        %671 = vst.msk [vmem:[#allocation2] sm:$0xff] %vm603, %v585
        %v672 = vld [vmem:[%s305] sm:$0xf]
        %v673 = vld [vmem:[%s314] sm:$0xf]
        %v674 = vld [vmem:[%s314 + $0x4] sm:$0xf]
        %v675 = vld [vmem:[%s323] sm:$0xf]
        %v676 = vld [vmem:[%s323 + $0x4] sm:$0xf]
        %v678 = vunpack.c.l.b16 %v672
        %v679 = vpack.c.b16 %v678, %v678
        %680 = vrot.lane.b32.xlu0 %v679, 112
        %v681 = vpop.permute.xlu0 %680
        %v684 = vunpack.c.l.b16 %v673
        %v685 = vunpack.c.l.b16 %v674
        %v686 = vpack.c.b16 %v685, %v684
        %687 = vrot.lane.b32.xlu0 %v686, 112
        %v688 = vpop.permute.xlu0 %687
        %v690 = vsel %vm386, %v681, 0
        %v693 = vsel %vm386, %v688, 0
        %695 = vmatprep.subr.bf16.mxu0 0
        %696 = vmatpush1.bf16.xpose.msra.mxu0 %v693
        %697 = vmatprep.subr.bf16.mxu0 0
        %698 = vmatpush1.bf16.xpose.msra.mxu0 0
        %699 = vmatprep.subr.bf16.mxu0 0
        %700 = vmatpush1.bf16.xpose.msra.mxu0 0
        %701 = vmatprep.subr.bf16.mxu0 0
        %702 = vmatpush1.bf16.xpose.msra.mxu0 0
        %703 = vmatprep.subr.bf16.mxu0 0
        %704 = vmatpush1.bf16.xpose.msra.mxu0 0
        %705 = vmatprep.subr.bf16.mxu0 0
        %706 = vmatpush1.bf16.xpose.msra.mxu0 0
        %707 = vmatprep.subr.bf16.mxu0 0
        %708 = vmatpush1.bf16.xpose.msra.mxu0 0
        %709 = vmatprep.subr.bf16.mxu0 0
        %710 = vmatpush1.bf16.xpose.msra.mxu0 0
        %711 = vmatprep.subr.bf16.mxu0 0
        %712 = vmatpush1.bf16.xpose.msra.mxu0 0
        %713 = vmatprep.subr.bf16.mxu0 0
        %714 = vmatpush1.bf16.xpose.msra.mxu0 0
        %715 = vmatprep.subr.bf16.mxu0 0
        %716 = vmatpush1.bf16.xpose.msra.mxu0 0
        %717 = vmatprep.subr.bf16.mxu0 0
        %718 = vmatpush1.bf16.xpose.msra.mxu0 0
        %719 = vmatprep.subr.bf16.mxu0 0
        %720 = vmatpush1.bf16.xpose.msra.mxu0 0
        %721 = vmatprep.subr.bf16.mxu0 0
        %722 = vmatpush1.bf16.xpose.msra.mxu0 0
        %723 = vmatprep.subr.bf16.mxu0 0
        %724 = vmatpush1.bf16.xpose.msra.mxu0 0
        %725 = vmatprep.subr.bf16.mxu0 0
        %726 = vmatpush1.bf16.xpose.msra.mxu0 0
        %727 = vmatprep.mubr.bf16.mxu0 0
        %728 = vmatmul.mubr.bf16.gmra.mrb[0].mxu0 %v690
        %v729 = vpop.f32.mrb[0].mxu0
        %v730 = vadd.f32 0.0, %v729
        %v731 = vpop.f32.mrb[0].mxu0
        %v732 = vpop.f32.mrb[0].mxu0
        %v733 = vpop.f32.mrb[0].mxu0
        %734 = vdwg.mxu0
        %v735 = vld [vmem:[#allocation2] sm:$0xff]
        %v736 = vsel %vm434, %v730, -inf
        %737 = vmax.xlane.f32.xlu0 %v736
        %v738 = vpop.xlane.xlu0 %737
        %v739 = vmax.f32 %v735, %v738
        %v740 = vsub.f32 %v735, %v739
        %v741 = vmul.f32 %v740, 1.442695
        %v742 = vpow.pop %v741
        %744 = vset.pattern.permute.xlu0 2
        %745 = vperm.xlu0 %744, %v739
        %v746 = vpop.permute.xlu0 %745
        %v748 = vsub.f32 %v730, %v746
        %v749 = vmul.f32 %v748, 1.442695
        %v750 = vpow.pop %v749
        %v751 = vld [vmem:[#allocation3] sm:$0xff]
        %v752 = vmul.f32 %v742, %v751
        %v753 = vsel %vm434, %v750, 0.0
        %754 = vadd.xlane.f32.xlu0 %v753
        %v755 = vpop.xlane.xlu0 %754
        %v756 = vadd.f32 %v752, %v755
        %vm757 = vcmask 23568
        %758 = vst.msk [vmem:[#allocation3] sm:$0xff] %vm757, %v756
        %v759 = vpack.c.bf16 %v750, %v750
        %v762 = vunpack.c.l.b16 %v675
        %v763 = vunpack.c.l.b16 %v676
        %v764 = vpack.c.b16 %v763, %v762
        %765 = vrot.lane.b32.xlu0 %v764, 112
        %v766 = vpop.permute.xlu0 %765
        %v769 = vsel %vm434, %v759, 0
        %771 = vmatprep.subr.bf16.mxu0 0
        %772 = vmatpush1.bf16.msra.mxu0 %v766
        %773 = vmatprep.subr.bf16.mxu0 0
        %774 = vmatpush1.bf16.msra.mxu0 0
        %775 = vmatprep.subr.bf16.mxu0 0
        %776 = vmatpush1.bf16.msra.mxu0 0
        %777 = vmatprep.subr.bf16.mxu0 0
        %778 = vmatpush1.bf16.msra.mxu0 0
        %779 = vmatprep.subr.bf16.mxu0 0
        %780 = vmatpush1.bf16.msra.mxu0 0
        %781 = vmatprep.subr.bf16.mxu0 0
        %782 = vmatpush1.bf16.msra.mxu0 0
        %783 = vmatprep.subr.bf16.mxu0 0
        %784 = vmatpush1.bf16.msra.mxu0 0
        %785 = vmatprep.subr.bf16.mxu0 0
        %786 = vmatpush1.bf16.msra.mxu0 0
        %787 = vmatprep.subr.bf16.mxu0 0
        %788 = vmatpush1.bf16.msra.mxu0 0
        %789 = vmatprep.subr.bf16.mxu0 0
        %790 = vmatpush1.bf16.msra.mxu0 0
        %791 = vmatprep.subr.bf16.mxu0 0
        %792 = vmatpush1.bf16.msra.mxu0 0
        %793 = vmatprep.subr.bf16.mxu0 0
        %794 = vmatpush1.bf16.msra.mxu0 0
        %795 = vmatprep.subr.bf16.mxu0 0
        %796 = vmatpush1.bf16.msra.mxu0 0
        %797 = vmatprep.subr.bf16.mxu0 0
        %798 = vmatpush1.bf16.msra.mxu0 0
        %799 = vmatprep.subr.bf16.mxu0 0
        %800 = vmatpush1.bf16.msra.mxu0 0
        %801 = vmatprep.subr.bf16.mxu0 0
        %802 = vmatpush1.bf16.msra.mxu0 0
        %803 = vmatprep.mubr.bf16.mxu0 0
        %804 = vmatmul.mubr.bf16.gmra.mrb[0].mxu0 %v769
        %v805 = vpop.f32.mrb[0].mxu0
        %v806 = vadd.f32 0.0, %v805
        %v807 = vpop.f32.mrb[0].mxu0
        %v808 = vpop.f32.mrb[0].mxu0
        %v809 = vpop.f32.mrb[0].mxu0
        %810 = vdwg.mxu0
        %v811 = vld [vmem:[#allocation4] sm:$0xff]
        %813 = vset.pattern.permute.xlu0 2
        %814 = vperm.xlu0 %813, %v742
        %v815 = vpop.permute.xlu0 %814
        %v817 = vmul.f32 %v815, %v811
        %819 = vrot.lane.b32.xlu0 %v806, 16
        %v820 = vpop.permute.xlu0 %819
        %v822 = vadd.f32 %v817, %v820
        %vm823 = vcmask 195712
        %824 = vst.msk [vmem:[#allocation4] sm:$0xff] %vm823, %v822
        %825 = vst.msk [vmem:[#allocation2] sm:$0xff] %vm757, %v739
        %v826 = vld [vmem:[%s305] sm:$0xf]
        %v827 = vld [vmem:[%s314] sm:$0xf]
        %v828 = vld [vmem:[%s314 + $0x4] sm:$0xf]
        %v829 = vld [vmem:[%s323] sm:$0xf]
        %v830 = vld [vmem:[%s323 + $0x4] sm:$0xf]
        %v832 = vunpack.c.l.b16 %v826
        %v833 = vpack.c.b16 %v832, %v832
        %834 = vrot.lane.b32.xlu0 %v833, 104
        %v835 = vpop.permute.xlu0 %834
        %v838 = vunpack.c.l.b16 %v827
        %v839 = vunpack.c.l.b16 %v828
        %v840 = vpack.c.b16 %v839, %v838
        %841 = vrot.lane.b32.xlu0 %v840, 104
        %v842 = vpop.permute.xlu0 %841
        %v844 = vsel %vm386, %v835, 0
        %v847 = vsel %vm386, %v842, 0
        %849 = vmatprep.subr.bf16.mxu0 0
        %850 = vmatpush1.bf16.xpose.msra.mxu0 %v847
        %851 = vmatprep.subr.bf16.mxu0 0
        %852 = vmatpush1.bf16.xpose.msra.mxu0 0
        %853 = vmatprep.subr.bf16.mxu0 0
        %854 = vmatpush1.bf16.xpose.msra.mxu0 0
        %855 = vmatprep.subr.bf16.mxu0 0
        %856 = vmatpush1.bf16.xpose.msra.mxu0 0
        %857 = vmatprep.subr.bf16.mxu0 0
        %858 = vmatpush1.bf16.xpose.msra.mxu0 0
        %859 = vmatprep.subr.bf16.mxu0 0
        %860 = vmatpush1.bf16.xpose.msra.mxu0 0
        %861 = vmatprep.subr.bf16.mxu0 0
        %862 = vmatpush1.bf16.xpose.msra.mxu0 0
        %863 = vmatprep.subr.bf16.mxu0 0
        %864 = vmatpush1.bf16.xpose.msra.mxu0 0
        %865 = vmatprep.subr.bf16.mxu0 0
        %866 = vmatpush1.bf16.xpose.msra.mxu0 0
        %867 = vmatprep.subr.bf16.mxu0 0
        %868 = vmatpush1.bf16.xpose.msra.mxu0 0
        %869 = vmatprep.subr.bf16.mxu0 0
        %870 = vmatpush1.bf16.xpose.msra.mxu0 0
        %871 = vmatprep.subr.bf16.mxu0 0
        %872 = vmatpush1.bf16.xpose.msra.mxu0 0
        %873 = vmatprep.subr.bf16.mxu0 0
        %874 = vmatpush1.bf16.xpose.msra.mxu0 0
        %875 = vmatprep.subr.bf16.mxu0 0
        %876 = vmatpush1.bf16.xpose.msra.mxu0 0
        %877 = vmatprep.subr.bf16.mxu0 0
        %878 = vmatpush1.bf16.xpose.msra.mxu0 0
        %879 = vmatprep.subr.bf16.mxu0 0
        %880 = vmatpush1.bf16.xpose.msra.mxu0 0
        %881 = vmatprep.mubr.bf16.mxu0 0
        %882 = vmatmul.mubr.bf16.gmra.mrb[0].mxu0 %v844
        %v883 = vpop.f32.mrb[0].mxu0
        %v884 = vadd.f32 0.0, %v883
        %v885 = vpop.f32.mrb[0].mxu0
        %v886 = vpop.f32.mrb[0].mxu0
        %v887 = vpop.f32.mrb[0].mxu0
        %888 = vdwg.mxu0
        %v889 = vld [vmem:[#allocation2] sm:$0xff]
        %v890 = vsel %vm434, %v884, -inf
        %891 = vmax.xlane.f32.xlu0 %v890
        %v892 = vpop.xlane.xlu0 %891
        %v893 = vmax.f32 %v889, %v892
        %v894 = vsub.f32 %v889, %v893
        %v895 = vmul.f32 %v894, 1.442695
        %v896 = vpow.pop %v895
        %898 = vset.pattern.permute.xlu0 3
        %899 = vperm.xlu0 %898, %v893
        %v900 = vpop.permute.xlu0 %899
        %v902 = vsub.f32 %v884, %v900
        %v903 = vmul.f32 %v902, 1.442695
        %v904 = vpow.pop %v903
        %v905 = vld [vmem:[#allocation3] sm:$0xff]
        %v906 = vmul.f32 %v896, %v905
        %v907 = vsel %vm434, %v904, 0.0
        %908 = vadd.xlane.f32.xlu0 %v907
        %v909 = vpop.xlane.xlu0 %908
        %v910 = vadd.f32 %v906, %v909
        %vm911 = vcmask 31768
        %912 = vst.msk [vmem:[#allocation3] sm:$0xff] %vm911, %v910
        %v913 = vpack.c.bf16 %v904, %v904
        %v916 = vunpack.c.l.b16 %v829
        %v917 = vunpack.c.l.b16 %v830
        %v918 = vpack.c.b16 %v917, %v916
        %919 = vrot.lane.b32.xlu0 %v918, 104
        %v920 = vpop.permute.xlu0 %919
        %v923 = vsel %vm434, %v913, 0
        %925 = vmatprep.subr.bf16.mxu0 0
        %926 = vmatpush1.bf16.msra.mxu0 %v920
        %927 = vmatprep.subr.bf16.mxu0 0
        %928 = vmatpush1.bf16.msra.mxu0 0
        %929 = vmatprep.subr.bf16.mxu0 0
        %930 = vmatpush1.bf16.msra.mxu0 0
        %931 = vmatprep.subr.bf16.mxu0 0
        %932 = vmatpush1.bf16.msra.mxu0 0
        %933 = vmatprep.subr.bf16.mxu0 0
        %934 = vmatpush1.bf16.msra.mxu0 0
        %935 = vmatprep.subr.bf16.mxu0 0
        %936 = vmatpush1.bf16.msra.mxu0 0
        %937 = vmatprep.subr.bf16.mxu0 0
        %938 = vmatpush1.bf16.msra.mxu0 0
        %939 = vmatprep.subr.bf16.mxu0 0
        %940 = vmatpush1.bf16.msra.mxu0 0
        %941 = vmatprep.subr.bf16.mxu0 0
        %942 = vmatpush1.bf16.msra.mxu0 0
        %943 = vmatprep.subr.bf16.mxu0 0
        %944 = vmatpush1.bf16.msra.mxu0 0
        %945 = vmatprep.subr.bf16.mxu0 0
        %946 = vmatpush1.bf16.msra.mxu0 0
        %947 = vmatprep.subr.bf16.mxu0 0
        %948 = vmatpush1.bf16.msra.mxu0 0
        %949 = vmatprep.subr.bf16.mxu0 0
        %950 = vmatpush1.bf16.msra.mxu0 0
        %951 = vmatprep.subr.bf16.mxu0 0
        %952 = vmatpush1.bf16.msra.mxu0 0
        %953 = vmatprep.subr.bf16.mxu0 0
        %954 = vmatpush1.bf16.msra.mxu0 0
        %955 = vmatprep.subr.bf16.mxu0 0
        %956 = vmatpush1.bf16.msra.mxu0 0
        %957 = vmatprep.mubr.bf16.mxu0 0
        %958 = vmatmul.mubr.bf16.gmra.mrb[0].mxu0 %v923
        %v959 = vpop.f32.mrb[0].mxu0
        %v960 = vadd.f32 0.0, %v959
        %v961 = vpop.f32.mrb[0].mxu0
        %v962 = vpop.f32.mrb[0].mxu0
        %v963 = vpop.f32.mrb[0].mxu0
        %964 = vdwg.mxu0
        %v965 = vld [vmem:[#allocation4] sm:$0xff]
        %967 = vset.pattern.permute.xlu0 3
        %968 = vperm.xlu0 %967, %v896
        %v969 = vpop.permute.xlu0 %968
        %v971 = vmul.f32 %v969, %v965
        %973 = vrot.lane.b32.xlu0 %v960, 24
        %v974 = vpop.permute.xlu0 %973
        %v976 = vadd.f32 %v971, %v974
        %vm977 = vcmask 261312
        %978 = vst.msk [vmem:[#allocation4] sm:$0xff] %vm977, %v976
        %979 = vst.msk [vmem:[#allocation2] sm:$0xff] %vm911, %v893
        // Predicated region
        $region61: #{tpu_custom_call.1} parent=39 // pred_check
          %p980 = pneg %p367
        $region62: #{tpu_custom_call.1} parent=39 // pred_check_branch
          %982 = sbr.rel (%p980) target = $region64
        $region63: #{tpu_custom_call.1} parent=39 // pred_region
          %v983 = vld [vmem:[#allocation3] sm:$0xff]
          %v984 = vrcp.pop %v983
          %v985 = vld [vmem:[#allocation4] sm:$0xff]
          %987 = vset.pattern.permute.xlu0 0
          %988 = vperm.xlu0 %987, %v984
          %v989 = vpop.permute.xlu0 %988
          %v991 = vmul.f32 %v985, %v989
          %992 = vst.msk [vmem:[#allocation4] sm:$0xff] %vm386, %v991
          %v993 = vld [vmem:[#allocation3] sm:$0xff]
          %v994 = vrcp.pop %v993
          %v995 = vld [vmem:[#allocation4] sm:$0xff]
          %997 = vset.pattern.permute.xlu0 1
          %998 = vperm.xlu0 %997, %v994
          %v999 = vpop.permute.xlu0 %998
          %v1001 = vmul.f32 %v995, %v999
          %1002 = vst.msk [vmem:[#allocation4] sm:$0xff] %vm669, %v1001
          %v1003 = vld [vmem:[#allocation3] sm:$0xff]
          %v1004 = vrcp.pop %v1003
          %v1005 = vld [vmem:[#allocation4] sm:$0xff]
          %1007 = vset.pattern.permute.xlu0 2
          %1008 = vperm.xlu0 %1007, %v1004
          %v1009 = vpop.permute.xlu0 %1008
          %v1011 = vmul.f32 %v1005, %v1009
          %1012 = vst.msk [vmem:[#allocation4] sm:$0xff] %vm823, %v1011
          %v1013 = vld [vmem:[#allocation3] sm:$0xff]
          %v1014 = vrcp.pop %v1013
          %v1015 = vld [vmem:[#allocation4] sm:$0xff]
          %1017 = vset.pattern.permute.xlu0 3
          %1018 = vperm.xlu0 %1017, %v1014
          %v1019 = vpop.permute.xlu0 %1018
          %v1021 = vmul.f32 %v1015, %v1019
          %1022 = vst.msk [vmem:[#allocation4] sm:$0xff] %vm977, %v1021
          %v1023 = vld [vmem:[#allocation4] sm:$0xff]
          %v1024 = vpack.c.bf16 %v1023, %v1023
          %v1025 = vld [vmem:[#allocation11] sm:$0xf]
          %v1026 = vld [vmem:[#allocation11 + $0x4] sm:$0xf]
          %v1027 = vld [vmem:[#allocation11 + $0x8] sm:$0xf]
          %v1028 = vld [vmem:[#allocation11 + $0xc] sm:$0xf]
          %v1029 = vld [vmem:[%s4] sm:$0x1]
          %v1031 = vlaneseq
          %v1032 = vshrl.u32 %v1031, 7
          %v1033 = vsub.s32 0, %v1032
          %v1034 = vrot.slane %v1029, %v1033
          %v1040 = vunpack.c.l.b16 %v1025
          %v1041 = vunpack.c.l.b16 %v1026
          %v1042 = vunpack.c.l.b16 %v1027
          %v1043 = vunpack.c.l.b16 %v1028
          %v1044 = vpack.c.b16 %v1041, %v1040
          %v1045 = vpack.c.b16 %v1043, %v1042
          %vm1048 = vcmask 261120
          %v1050 = vsel %vm1048, %v1024, 0
          %1052 = vmatprep.subr.bf16.mxu0 0
          %1053 = vmatpush1.bf16.msra.mxu0 %v1044
          %1054 = vmatprep.subr.bf16.mxu0 0
          %1055 = vmatpush1.bf16.msra.mxu0 %v1045
          %1056 = vmatprep.subr.bf16.mxu0 0
          %1057 = vmatpush1.bf16.msra.mxu0 0
          %1058 = vmatprep.subr.bf16.mxu0 0
          %1059 = vmatpush1.bf16.msra.mxu0 0
          %1060 = vmatprep.subr.bf16.mxu0 0
          %1061 = vmatpush1.bf16.msra.mxu0 0
          %1062 = vmatprep.subr.bf16.mxu0 0
          %1063 = vmatpush1.bf16.msra.mxu0 0
          %1064 = vmatprep.subr.bf16.mxu0 0
          %1065 = vmatpush1.bf16.msra.mxu0 0
          %1066 = vmatprep.subr.bf16.mxu0 0
          %1067 = vmatpush1.bf16.msra.mxu0 0
          %1068 = vmatprep.subr.bf16.mxu0 0
          %1069 = vmatpush1.bf16.msra.mxu0 0
          %1070 = vmatprep.subr.bf16.mxu0 0
          %1071 = vmatpush1.bf16.msra.mxu0 0
          %1072 = vmatprep.subr.bf16.mxu0 0
          %1073 = vmatpush1.bf16.msra.mxu0 0
          %1074 = vmatprep.subr.bf16.mxu0 0
          %1075 = vmatpush1.bf16.msra.mxu0 0
          %1076 = vmatprep.subr.bf16.mxu0 0
          %1077 = vmatpush1.bf16.msra.mxu0 0
          %1078 = vmatprep.subr.bf16.mxu0 0
          %1079 = vmatpush1.bf16.msra.mxu0 0
          %1080 = vmatprep.subr.bf16.mxu0 0
          %1081 = vmatpush1.bf16.msra.mxu0 0
          %1082 = vmatprep.subr.bf16.mxu0 0
          %1083 = vmatpush1.bf16.msra.mxu0 0
          %1084 = vmatprep.mubr.bf16.mxu0 0
          %1085 = vmatmul.mubr.bf16.gmra.mrb[0].mxu0 %v1050
          %v1086 = vpop.f32.mrb[0].mxu0
          %v1087 = vadd.f32 %v1034, %v1086
          %v1088 = vpop.f32.mrb[0].mxu0
          %v1089 = vpop.f32.mrb[0].mxu0
          %v1090 = vpop.f32.mrb[0].mxu0
          %1091 = vdwg.mxu0
          %1092 = vst.msk [vmem:[%s363] sm:$0xff] %vm1048, %v1087
        $region64: #{tpu_custom_call.1} parent=39 // pred_fallthru
          _
        %s1093 = sand.u32 %s181, 1
        %s1094 = scalar_lea.sflag [#allocation7], %s1093
        %s1095 = sand.u32 %s181, 1
        %s1096 = smul.addr %s1095, 8
        %s1097 = scalar_lea.vmem [#allocation13], %s1096
        // Predicated region
        $region65: #{tpu_custom_call.1} parent=39 // pred_check
          %p1098 = pneg %p191
        $region66: #{tpu_custom_call.1} parent=39 // pred_check_branch
          %1100 = sbr.rel (%p1098) target = $region68
        $region67: #{tpu_custom_call.1} parent=39 // pred_region
          %s1102 = ssub.s32 128, 128
          %1103 = vsyncadd %s1094, %s1102
          %s1104 = sadd.s32 %s32, %s31
          %s1105 = smul.addr %s1104, 128
          %s1106 = scalar_lea.hbm %s5, %s1105
          %s1108 = sshll.u32 %s1097, 4
          %s1109 = int_to_ptr.vmem [resolvable:$true] %s1108
          %1111 = dma.vmem_to_hbm [thread:$0]  %s1109, 128, %s1106, %s1094
        $region68: #{tpu_custom_call.1} parent=39 // pred_fallthru
          _
      $region40: #{tpu_custom_call.1} parent=5 // pred_fallthru
        _
      %p1112 = scmp.le.s32.totalorder 2, %s21
      // Predicated region
      $region69: #{tpu_custom_call.1} parent=5 // pred_check
        %p1113 = pneg %p1112
      $region70: #{tpu_custom_call.1} parent=5 // pred_check_branch
        %1115 = sbr.rel (%p1113) target = $region72
      $region71: #{tpu_custom_call.1} parent=5 // pred_region
        %s1116 = ssub.s32 %s21, 2
        // Predicated region
        $region73: #{tpu_custom_call.1} parent=71 // pred_check
          %p1117 = pneg %p197
        $region74: #{tpu_custom_call.1} parent=71 // pred_check_branch
          %1119 = sbr.rel (%p1117) target = $region76
        $region75: #{tpu_custom_call.1} parent=71 // pred_region
          %s1120 = sand.u32 %s182, 1
          %s1121 = scalar_lea.sflag [#allocation7], %s1120
          %s1122 = sand.u32 %s182, 1
          %s1123 = smul.addr %s1122, 8
          %s1124 = scalar_lea.vmem [#allocation13], %s1123
          %1125 = dma.done %s1121, 128
        $region76: #{tpu_custom_call.1} parent=71 // pred_fallthru
          _
      $region72: #{tpu_custom_call.1} parent=5 // pred_fallthru
        _
    $region6: #{tpu_custom_call.1} parent=1 // loop_footer
      %s25 = sadd.s32 1, %s21
    $region7: #{tpu_custom_call.1} parent=1 // loop_footer_branch
      %20 = sbr.rel target = $region3
    $region8: #{tpu_custom_call.1} parent=1 // loop_exit
      _
    %1126 = vsyncpa [#allocation6], 1
    %s1127 = scalar_lea.sflag [#allocation6], 1
    %1128 = vsyncpa %s1127, 1
    %1129 = vsyncpa [#allocation9], 1
    %s1130 = scalar_lea.sflag [#allocation9], 1
    %1131 = vsyncpa %s1130, 1
    %1132 = vsyncpa [#allocation12], 1
    %1133 = vsyncpa [#allocation7], 1
    %s1134 = scalar_lea.sflag [#allocation7], 1
    %1135 = vsyncpa %s1134, 1

</llo_original>
